<compile_context>
chip_gen: v6e
topology: v6e:2x2x1
jax: 0.10.0
libtpu: 0.0.40
codegen_flags: <defaults>
</compile_context>

<pallas_src>
import jax
import jax.numpy as jnp
from jax.experimental import pallas as pl
from jax.experimental.pallas import tpu as pltpu


SUBLANE = 8        # f32 sublane height
MAX_TILE_B = 2048  # big tiles amortize per-grid-step overhead; VMEM is a non-issue


def _round_up(x, m):
    return ((x + m - 1) // m) * m


def _choose_tile_b(B, max_tile=MAX_TILE_B):
    """Pick a batch tile: multiple of 8, <= max_tile, and >= 2 grid steps for
    large batches (so v7x's two TensorCores both get work). For tiny batches
    a single block equal to the full batch is used (block == full dim is
    always a legal block shape)."""
    if B < 2 * SUBLANE:
        return B
    return min(max_tile, _round_up(pl.cdiv(B, 2), SUBLANE))


def dqn_kernel(x_ref,
               w0_ref, b0_ref,
               w1_ref, b1_ref,
               w2_ref, b2_ref,
               w3_ref, b3_ref,
               o_ref):
    """Fused: Linear -> ReLU -> Linear -> ReLU -> Linear -> ReLU -> Linear.

    x_ref is a (tile_b, n_obs) batch tile; weights/biases are whole arrays
    resident in VMEM across all grid steps (constant index_map)."""
    x = x_ref[...]
    prec = jax.lax.Precision.HIGHEST

    h0 = jnp.dot(x, w0_ref[...], preferred_element_type=jnp.float32,
                 precision=prec) + b0_ref[...]
    h0 = jnp.maximum(h0, 0.0)

    h1 = jnp.dot(h0, w1_ref[...], preferred_element_type=jnp.float32,
                 precision=prec) + b1_ref[...]
    h1 = jnp.maximum(h1, 0.0)

    h2 = jnp.dot(h1, w2_ref[...], preferred_element_type=jnp.float32,
                 precision=prec) + b2_ref[...]
    h2 = jnp.maximum(h2, 0.0)

    logits = jnp.dot(h2, w3_ref[...], preferred_element_type=jnp.float32,
                     precision=prec) + b3_ref[...]
    o_ref[...] = logits.astype(o_ref.dtype)


def dqn_forward(x, params, tile_b=None):
    """Forward pass.

    x      : (B, n_observations) float32.
    params : list of 4 (W, b) with W: (in, out), b: (1, out).
    returns: (B, n_actions) float32 logits.
    """
    (w0, b0), (w1, b1), (w2, b2), (w3, b3) = params
    B, n_obs = x.shape
    n_actions = w3.shape[1]

    if tile_b is None:
        tile_b = _choose_tile_b(B)
    grid = (pl.cdiv(B, tile_b),)

    # Activations: tiled along batch (pipelined; last block clipped/masked if
    # B % tile_b != 0).  Weights/biases: whole-array blocks with a constant
    # index_map -> DMA'd once, resident across all grid steps.
    def const_spec(shape):
        return pl.BlockSpec(shape, lambda i: (0, 0))

    x_spec = pl.BlockSpec((tile_b, n_obs), lambda i: (i, 0))
    out_spec = pl.BlockSpec((tile_b, n_actions), lambda i: (i, 0))

    in_specs = [
        x_spec,
        const_spec(w0.shape), const_spec(b0.shape),
        const_spec(w1.shape), const_spec(b1.shape),
        const_spec(w2.shape), const_spec(b2.shape),
        const_spec(w3.shape), const_spec(b3.shape),
    ]

    # Advisory cost hint so XLA schedules this small call tightly.
    d0, d1, d2 = w0.shape[1], w1.shape[1], w2.shape[1]
    flops = 2 * B * (n_obs * d0 + d0 * d1 + d1 * d2 + d2 * n_actions)
    weight_bytes = sum(int(a.size) * 4 for a in (w0, b0, w1, b1, w2, b2, w3, b3))
    bytes_accessed = B * (n_obs + n_actions) * 4 + weight_bytes
    cost = pl.CostEstimate(flops=flops, transcendentals=0,
                           bytes_accessed=bytes_accessed)

    out = pl.pallas_call(
        dqn_kernel,
        out_shape=jax.ShapeDtypeStruct((B, n_actions), jnp.float32),
        grid=grid,
        in_specs=in_specs,
        out_specs=out_spec,
        compiler_params=pltpu.CompilerParams(
            dimension_semantics=("parallel",),  # lets v7x split batch across 2 TCs
        ),
        cost_estimate=cost,
    )(x, w0, b0, w1, b1, w2, b2, w3, b3)

    return out


def init_linear(key, fan_in, fan_out):
    """Deterministic PyTorch-style init: U(-1/sqrt(fan_in), 1/sqrt(fan_in))."""
    kw, kb = jax.random.split(key)
    bound = 1.0 / (fan_in ** 0.5)
    w = jax.random.uniform(kw, (fan_in, fan_out), jnp.float32, -bound, bound)
    b = jax.random.uniform(kb, (1, fan_out), jnp.float32, -bound, bound)
    return w, b


def dqn_reference(x, params):
    h = x
    for i, (w, b) in enumerate(params):
        h = h @ w + b
        if i < len(params) - 1:
            h = jnp.maximum(h, 0.0)
    return h


if __name__ == "__main__":
    # Small shapes consistent with the module:
    #   n_observations=32, settings=(64, 64, 32), n_actions=8, batch=2
    n_observations = 32
    settings = (64, 64, 32)
    n_actions = 8
    batch = 2

    key = jax.random.PRNGKey(0)
    k_x, k0, k1, k2, k3 = jax.random.split(key, 5)

    dims = [n_observations, settings[0], settings[1], settings[2], n_actions]
    layer_keys = [k0, k1, k2, k3]
    params = [init_linear(layer_keys[i], dims[i], dims[i + 1]) for i in range(4)]

    x = jax.random.normal(k_x, (batch, n_observations), jnp.float32)

    out = dqn_forward(x, params)
    out = jax.block_until_ready(out)

    ref = dqn_reference(x, params)
    assert out.shape == (batch, n_actions)
    assert jnp.allclose(out, ref, atol=1e-5, rtol=1e-5), "mismatch vs reference"

    # Training-sized batch exercising multiple grid steps (tile_b=256, grid=2).
    big_batch = 512
    xb = jax.random.normal(jax.random.PRNGKey(1), (big_batch, n_observations),
                           jnp.float32)
    out_b = jax.block_until_ready(dqn_forward(xb, params))
    ref_b = dqn_reference(xb, params)
    assert out_b.shape == (big_batch, n_actions)
    assert jnp.allclose(out_b, ref_b, atol=1e-5, rtol=1e-5), "mismatch (batched)"

    # Non-divisible batch exercising the clipped/masked final partial block.
    odd_batch = 500
    xo = jax.random.normal(jax.random.PRNGKey(2), (odd_batch, n_observations),
                           jnp.float32)
    out_o = jax.block_until_ready(dqn_forward(xo, params))
    ref_o = dqn_reference(xo, params)
    assert out_o.shape == (odd_batch, n_actions)
    assert jnp.allclose(out_o, ref_o, atol=1e-5, rtol=1e-5), "mismatch (partial block)"

    print("KERNEL_OK")
</pallas_src>

<mosaic_0001>
module attributes {stable_mosaic.version = 11 : i64} {
  func.func @dqn_kernel(%arg0: i32, %arg1: memref<2x32xf32, #tpu.memory_space<vmem>>, %arg2: memref<32x64xf32, #tpu.memory_space<vmem>>, %arg3: memref<1x64xf32, #tpu.memory_space<vmem>>, %arg4: memref<64x64xf32, #tpu.memory_space<vmem>>, %arg5: memref<1x64xf32, #tpu.memory_space<vmem>>, %arg6: memref<64x32xf32, #tpu.memory_space<vmem>>, %arg7: memref<1x32xf32, #tpu.memory_space<vmem>>, %arg8: memref<32x8xf32, #tpu.memory_space<vmem>>, %arg9: memref<1x8xf32, #tpu.memory_space<vmem>>, %arg10: memref<2x8xf32, #tpu.memory_space<vmem>>) attributes {dimension_semantics = [#tpu.dimension_semantics<parallel>], iteration_bounds = array<i64: 1>, scalar_prefetch = 0 : i64, scratch_operands = 0 : i64, tpu.core_type = #tpu.core_type<tc>, window_params = [{transform_indices = @transform_0, window_bounds = array<i64: 2, 32>}, {pipeline_mode = #tpu.pipeline_mode<synchronous>, transform_indices = @transform_1, window_bounds = array<i64: 32, 64>}, {pipeline_mode = #tpu.pipeline_mode<synchronous>, transform_indices = @transform_2, window_bounds = array<i64: 1, 64>}, {pipeline_mode = #tpu.pipeline_mode<synchronous>, transform_indices = @transform_3, window_bounds = array<i64: 64, 64>}, {pipeline_mode = #tpu.pipeline_mode<synchronous>, transform_indices = @transform_4, window_bounds = array<i64: 1, 64>}, {pipeline_mode = #tpu.pipeline_mode<synchronous>, transform_indices = @transform_5, window_bounds = array<i64: 64, 32>}, {pipeline_mode = #tpu.pipeline_mode<synchronous>, transform_indices = @transform_6, window_bounds = array<i64: 1, 32>}, {pipeline_mode = #tpu.pipeline_mode<synchronous>, transform_indices = @transform_7, window_bounds = array<i64: 32, 8>}, {pipeline_mode = #tpu.pipeline_mode<synchronous>, transform_indices = @transform_8, window_bounds = array<i64: 1, 8>}, {transform_indices = @transform_9, window_bounds = array<i64: 2, 8>}]} {
    %c0 = arith.constant 0 : index
    %c0_0 = arith.constant 0 : index
    %0 = vector.load %arg1[%c0, %c0_0] : memref<2x32xf32, #tpu.memory_space<vmem>>, vector<2x32xf32>
    %c0_1 = arith.constant 0 : index
    %c0_2 = arith.constant 0 : index
    %1 = vector.load %arg2[%c0_1, %c0_2] : memref<32x64xf32, #tpu.memory_space<vmem>>, vector<32x64xf32>
    %cst = arith.constant dense<0.000000e+00> : vector<2x64xf32>
    %2 = tpu.matmul %0, %1, %cst {dimension_numbers = #tpu.dot_dimension_numbers<[1], [0], [0], [1], [0, 0, 1, 1], [], []>, precision = #tpu.contract_precision<fp32>} : vector<2x32xf32>, vector<32x64xf32>, vector<2x64xf32> -> vector<2x64xf32>
    %c0_3 = arith.constant 0 : index
    %c0_4 = arith.constant 0 : index
    %3 = vector.load %arg3[%c0_3, %c0_4] : memref<1x64xf32, #tpu.memory_space<vmem>>, vector<1x64xf32>
    %4 = vector.broadcast %3 : vector<1x64xf32> to vector<2x64xf32>
    %5 = arith.addf %2, %4 : vector<2x64xf32>
    %cst_5 = arith.constant 0.000000e+00 : f32
    %6 = vector.broadcast %cst_5 : f32 to vector<2x64xf32>
    %7 = arith.maximumf %5, %6 : vector<2x64xf32>
    %c0_6 = arith.constant 0 : index
    %c0_7 = arith.constant 0 : index
    %8 = vector.load %arg4[%c0_6, %c0_7] : memref<64x64xf32, #tpu.memory_space<vmem>>, vector<64x64xf32>
    %cst_8 = arith.constant dense<0.000000e+00> : vector<2x64xf32>
    %9 = tpu.matmul %7, %8, %cst_8 {dimension_numbers = #tpu.dot_dimension_numbers<[1], [0], [0], [1], [0, 0, 1, 1], [], []>, precision = #tpu.contract_precision<fp32>} : vector<2x64xf32>, vector<64x64xf32>, vector<2x64xf32> -> vector<2x64xf32>
    %c0_9 = arith.constant 0 : index
    %c0_10 = arith.constant 0 : index
    %10 = vector.load %arg5[%c0_9, %c0_10] : memref<1x64xf32, #tpu.memory_space<vmem>>, vector<1x64xf32>
    %11 = vector.broadcast %10 : vector<1x64xf32> to vector<2x64xf32>
    %12 = arith.addf %9, %11 : vector<2x64xf32>
    %cst_11 = arith.constant 0.000000e+00 : f32
    %13 = vector.broadcast %cst_11 : f32 to vector<2x64xf32>
    %14 = arith.maximumf %12, %13 : vector<2x64xf32>
    %c0_12 = arith.constant 0 : index
    %c0_13 = arith.constant 0 : index
    %15 = vector.load %arg6[%c0_12, %c0_13] : memref<64x32xf32, #tpu.memory_space<vmem>>, vector<64x32xf32>
    %cst_14 = arith.constant dense<0.000000e+00> : vector<2x32xf32>
    %16 = tpu.matmul %14, %15, %cst_14 {dimension_numbers = #tpu.dot_dimension_numbers<[1], [0], [0], [1], [0, 0, 1, 1], [], []>, precision = #tpu.contract_precision<fp32>} : vector<2x64xf32>, vector<64x32xf32>, vector<2x32xf32> -> vector<2x32xf32>
    %c0_15 = arith.constant 0 : index
    %c0_16 = arith.constant 0 : index
    %17 = vector.load %arg7[%c0_15, %c0_16] : memref<1x32xf32, #tpu.memory_space<vmem>>, vector<1x32xf32>
    %18 = vector.broadcast %17 : vector<1x32xf32> to vector<2x32xf32>
    %19 = arith.addf %16, %18 : vector<2x32xf32>
    %cst_17 = arith.constant 0.000000e+00 : f32
    %20 = vector.broadcast %cst_17 : f32 to vector<2x32xf32>
    %21 = arith.maximumf %19, %20 : vector<2x32xf32>
    %c0_18 = arith.constant 0 : index
    %c0_19 = arith.constant 0 : index
    %22 = vector.load %arg8[%c0_18, %c0_19] : memref<32x8xf32, #tpu.memory_space<vmem>>, vector<32x8xf32>
    %cst_20 = arith.constant dense<0.000000e+00> : vector<2x8xf32>
    %23 = tpu.matmul %21, %22, %cst_20 {dimension_numbers = #tpu.dot_dimension_numbers<[1], [0], [0], [1], [0, 0, 1, 1], [], []>, precision = #tpu.contract_precision<fp32>} : vector<2x32xf32>, vector<32x8xf32>, vector<2x8xf32> -> vector<2x8xf32>
    %c0_21 = arith.constant 0 : index
    %c0_22 = arith.constant 0 : index
    %24 = vector.load %arg9[%c0_21, %c0_22] : memref<1x8xf32, #tpu.memory_space<vmem>>, vector<1x8xf32>
    %25 = vector.broadcast %24 : vector<1x8xf32> to vector<2x8xf32>
    %26 = arith.addf %23, %25 : vector<2x8xf32>
    %c0_23 = arith.constant 0 : index
    %c0_24 = arith.constant 0 : index
    %27 = vector.load %arg10[%c0_23, %c0_24] : memref<2x8xf32, #tpu.memory_space<vmem>>, vector<2x8xf32>
    tpu.vector_store %arg10[%c0_23, %c0_24], %26 {strides = array<i32>} : memref<2x8xf32, #tpu.memory_space<vmem>>, vector<2x8xf32>,
    return
  }
  func.func @transform_0(%arg0: i32) -> (i32, i32) {
    %c0_i32 = arith.constant 0 : i32
    %c0_i32_0 = arith.constant 0 : i32
    return %arg0, %c0_i32 : i32, i32
  }
  func.func @transform_1(%arg0: i32) -> (i32, i32) {
    %c0_i32 = arith.constant 0 : i32
    %c0_i32_0 = arith.constant 0 : i32
    %c0_i32_1 = arith.constant 0 : i32
    return %c0_i32, %c0_i32_0 : i32, i32
  }
  func.func @transform_2(%arg0: i32) -> (i32, i32) {
    %c0_i32 = arith.constant 0 : i32
    %c0_i32_0 = arith.constant 0 : i32
    %c0_i32_1 = arith.constant 0 : i32
    return %c0_i32, %c0_i32_0 : i32, i32
  }
  func.func @transform_3(%arg0: i32) -> (i32, i32) {
    %c0_i32 = arith.constant 0 : i32
    %c0_i32_0 = arith.constant 0 : i32
    %c0_i32_1 = arith.constant 0 : i32
    return %c0_i32, %c0_i32_0 : i32, i32
  }
  func.func @transform_4(%arg0: i32) -> (i32, i32) {
    %c0_i32 = arith.constant 0 : i32
    %c0_i32_0 = arith.constant 0 : i32
    %c0_i32_1 = arith.constant 0 : i32
    return %c0_i32, %c0_i32_0 : i32, i32
  }
  func.func @transform_5(%arg0: i32) -> (i32, i32) {
    %c0_i32 = arith.constant 0 : i32
    %c0_i32_0 = arith.constant 0 : i32
    %c0_i32_1 = arith.constant 0 : i32
    return %c0_i32, %c0_i32_0 : i32, i32
  }
  func.func @transform_6(%arg0: i32) -> (i32, i32) {
    %c0_i32 = arith.constant 0 : i32
    %c0_i32_0 = arith.constant 0 : i32
    %c0_i32_1 = arith.constant 0 : i32
    return %c0_i32, %c0_i32_0 : i32, i32
  }
  func.func @transform_7(%arg0: i32) -> (i32, i32) {
    %c0_i32 = arith.constant 0 : i32
    %c0_i32_0 = arith.constant 0 : i32
    %c0_i32_1 = arith.constant 0 : i32
    return %c0_i32, %c0_i32_0 : i32, i32
  }
  func.func @transform_8(%arg0: i32) -> (i32, i32) {
    %c0_i32 = arith.constant 0 : i32
    %c0_i32_0 = arith.constant 0 : i32
    %c0_i32_1 = arith.constant 0 : i32
    return %c0_i32, %c0_i32_0 : i32, i32
  }
  func.func @transform_9(%arg0: i32) -> (i32, i32) {
    %c0_i32 = arith.constant 0 : i32
    %c0_i32_0 = arith.constant 0 : i32
    return %arg0, %c0_i32 : i32, i32
  }
}

</mosaic_0001>

<llo_original>
// kernel: tpu_custom_call.1
$region0: #{tpu_custom_call.1}
  #allocation0 [shape = 'u32[]', space=smem, size = 0x4, offset = 0x4, fixed_abs, tag = 'smem constant byte address 0x4 - core index']
  #allocation1 [shape = 'u32[144,128]{1,0:T(1,128)}', space=vmem, size = 0x12000, scoped, tag = 'internal scratch']
  %s0 = inlined_call_operand.vmem [shape: f32[2,32], index: 0, kind: input, shape index: {}]
  %s1 = inlined_call_operand.vmem [shape: f32[32,64], index: 1, kind: input, shape index: {}]
  %s2 = inlined_call_operand.vmem [shape: f32[1,64], index: 2, kind: input, shape index: {}]
  %s3 = inlined_call_operand.vmem [shape: f32[64,64], index: 3, kind: input, shape index: {}]
  %s4 = inlined_call_operand.vmem [shape: f32[1,64], index: 4, kind: input, shape index: {}]
  %s5 = inlined_call_operand.vmem [shape: f32[64,32], index: 5, kind: input, shape index: {}]
  %s6 = inlined_call_operand.vmem [shape: f32[1,32], index: 6, kind: input, shape index: {}]
  %s7 = inlined_call_operand.vmem [shape: f32[32,8], index: 7, kind: input, shape index: {}]
  %s8 = inlined_call_operand.vmem [shape: f32[1,8], index: 8, kind: input, shape index: {}]
  %s9 = inlined_call_operand.hbm [shape: f32[2,8], index: 9, kind: output, shape index: {}]
  %s10 = sld [smem:[#allocation0]]
  $region46: #{tpu_custom_call.1} parent=0
    _
  %s12 = ssub.s32 1, %s10
  %s13 = scalar_select 0, %s12, %s10
  $region1: #{tpu_custom_call.1} parent=0
    #allocation2 [shape = 'u8[1024]{0}', space=vmem, size = 0x400, scoped, tag = 'output window, operand 0, single buffered']
    #allocation3 [shape = 's32[1]{0}', space=sflag, size = 0x4, scoped, tag = 'scoped memory for tpu_custom_call.1']
    %14 = vsyncpa [#allocation3], 0
    // Predicated region
    $region2: #{tpu_custom_call.1} parent=1 // pred_check
      _
    $region3: #{tpu_custom_call.1} parent=1 // pred_check_branch
      %16 = sbr.rel (0) target = $region5
    $region4: #{tpu_custom_call.1} parent=1 // pred_region
      _
    $region5: #{tpu_custom_call.1} parent=1 // pred_fallthru
      _
    // Predicated region
    $region6: #{tpu_custom_call.1} parent=1 // pred_check
      _
    $region7: #{tpu_custom_call.1} parent=1 // pred_check_branch
      %18 = sbr.rel (0) target = $region9
    $region8: #{tpu_custom_call.1} parent=1 // pred_region
      _
    $region9: #{tpu_custom_call.1} parent=1 // pred_fallthru
      _
    // Predicated region
    $region10: #{tpu_custom_call.1} parent=1 // pred_check
      _
    $region11: #{tpu_custom_call.1} parent=1 // pred_check_branch
      %20 = sbr.rel (0) target = $region13
    $region12: #{tpu_custom_call.1} parent=1 // pred_region
      _
    $region13: #{tpu_custom_call.1} parent=1 // pred_fallthru
      _
    // Predicated region
    $region14: #{tpu_custom_call.1} parent=1 // pred_check
      _
    $region15: #{tpu_custom_call.1} parent=1 // pred_check_branch
      %22 = sbr.rel (0) target = $region17
    $region16: #{tpu_custom_call.1} parent=1 // pred_region
      _
    $region17: #{tpu_custom_call.1} parent=1 // pred_fallthru
      _
    // Predicated region
    $region18: #{tpu_custom_call.1} parent=1 // pred_check
      _
    $region19: #{tpu_custom_call.1} parent=1 // pred_check_branch
      %24 = sbr.rel (0) target = $region21
    $region20: #{tpu_custom_call.1} parent=1 // pred_region
      _
    $region21: #{tpu_custom_call.1} parent=1 // pred_fallthru
      _
    // Predicated region
    $region22: #{tpu_custom_call.1} parent=1 // pred_check
      _
    $region23: #{tpu_custom_call.1} parent=1 // pred_check_branch
      %26 = sbr.rel (0) target = $region25
    $region24: #{tpu_custom_call.1} parent=1 // pred_region
      _
    $region25: #{tpu_custom_call.1} parent=1 // pred_fallthru
      _
    // Predicated region
    $region26: #{tpu_custom_call.1} parent=1 // pred_check
      _
    $region27: #{tpu_custom_call.1} parent=1 // pred_check_branch
      %28 = sbr.rel (0) target = $region29
    $region28: #{tpu_custom_call.1} parent=1 // pred_region
      _
    $region29: #{tpu_custom_call.1} parent=1 // pred_fallthru
      _
    // Predicated region
    $region30: #{tpu_custom_call.1} parent=1 // pred_check
      _
    $region31: #{tpu_custom_call.1} parent=1 // pred_check_branch
      %30 = sbr.rel (0) target = $region33
    $region32: #{tpu_custom_call.1} parent=1 // pred_region
      _
    $region33: #{tpu_custom_call.1} parent=1 // pred_fallthru
      _
    // Predicated region
    $region34: #{tpu_custom_call.1} parent=1 // pred_check
      _
    $region35: #{tpu_custom_call.1} parent=1 // pred_check_branch
      %32 = sbr.rel (0) target = $region37
    $region36: #{tpu_custom_call.1} parent=1 // pred_region
      _
    $region37: #{tpu_custom_call.1} parent=1 // pred_fallthru
      _
    %v33 = vld [vmem:[%s0] sm:$0x3]
    %v34 = vld [vmem:[%s1] sm:$0xff]
    %v35 = vld [vmem:[%s1 + $0x8] sm:$0xff]
    %v36 = vld [vmem:[%s1 + $0x10] sm:$0xff]
    %v37 = vld [vmem:[%s1 + $0x18] sm:$0xff]
    %v38 = vld [vmem:[%s2] sm:$0x1]
    %v40 = vlaneseq
    %v41 = vshrl.u32 %v40, 7
    %v42 = vsub.s32 0, %v41
    %v43 = vrot.slane %v38, %v42
    %vm45 = vcmask 261120
    %v47 = vsel %vm45, %v33, 0
    %49 = vmatprep.subr.mxu0 0.0
    %50 = vmatpush1.msra.mxu0 0.0
    %51 = vmatprep.subr.mxu0 0.0
    %52 = vmatpush1.msra.mxu0 0.0
    %53 = vmatprep.subr.mxu0 0.0
    %54 = vmatpush1.msra.mxu0 0.0
    %55 = vmatprep.subr.mxu0 0.0
    %56 = vmatpush1.msra.mxu0 0.0
    %57 = vmatprep.subr.mxu0 0.0
    %58 = vmatpush1.msra.mxu0 0.0
    %59 = vmatprep.subr.mxu0 0.0
    %60 = vmatpush1.msra.mxu0 0.0
    %61 = vmatprep.subr.mxu0 0.0
    %62 = vmatpush1.msra.mxu0 0.0
    %63 = vmatprep.subr.mxu0 0.0
    %64 = vmatpush1.msra.mxu0 0.0
    %65 = vmatprep.subr.mxu0 0.0
    %66 = vmatpush1.msra.mxu0 0.0
    %67 = vmatprep.subr.mxu0 0.0
    %68 = vmatpush1.msra.mxu0 0.0
    %69 = vmatprep.subr.mxu0 0.0
    %70 = vmatpush1.msra.mxu0 0.0
    %71 = vmatprep.subr.mxu0 0.0
    %72 = vmatpush1.msra.mxu0 0.0
    %73 = vmatprep.subr.mxu0 0.0
    %v74 = vand.u32 %v37, 4294901760
    %75 = vmatpush1.msra.mxu0 %v74
    %76 = vmatprep.subr.mxu0 0.0
    %v77 = vand.u32 %v36, 4294901760
    %78 = vmatpush1.msra.mxu0 %v77
    %79 = vmatprep.subr.mxu0 0.0
    %v80 = vand.u32 %v35, 4294901760
    %81 = vmatpush1.msra.mxu0 %v80
    %82 = vmatprep.subr.mxu0 0.0
    %v83 = vand.u32 %v34, 4294901760
    %84 = vmatpush1.msra.mxu0 %v83
    %85 = vmatprep.subr.mxu0 0.0
    %86 = vmatpush2.msra.mxu0 0.0
    %87 = vmatprep.subr.mxu0 0.0
    %88 = vmatpush2.msra.mxu0 0.0
    %89 = vmatprep.subr.mxu0 0.0
    %90 = vmatpush2.msra.mxu0 0.0
    %91 = vmatprep.subr.mxu0 0.0
    %92 = vmatpush2.msra.mxu0 0.0
    %93 = vmatprep.subr.mxu0 0.0
    %94 = vmatpush2.msra.mxu0 0.0
    %95 = vmatprep.subr.mxu0 0.0
    %96 = vmatpush2.msra.mxu0 0.0
    %97 = vmatprep.subr.mxu0 0.0
    %98 = vmatpush2.msra.mxu0 0.0
    %99 = vmatprep.subr.mxu0 0.0
    %100 = vmatpush2.msra.mxu0 0.0
    %101 = vmatprep.subr.mxu0 0.0
    %102 = vmatpush2.msra.mxu0 0.0
    %103 = vmatprep.subr.mxu0 0.0
    %104 = vmatpush2.msra.mxu0 0.0
    %105 = vmatprep.subr.mxu0 0.0
    %106 = vmatpush2.msra.mxu0 0.0
    %107 = vmatprep.subr.mxu0 0.0
    %108 = vmatpush2.msra.mxu0 0.0
    %109 = vmatprep.subr.mxu0 0.0
    %110 = vmatpush2.msra.mxu0 0.0
    %111 = vmatprep.subr.mxu0 0.0
    %112 = vmatpush2.msra.mxu0 0.0
    %113 = vmatprep.subr.mxu0 0.0
    %114 = vmatpush2.msra.mxu0 0.0
    %115 = vmatprep.subr.mxu0 0.0
    %116 = vmatpush2.msra.mxu0 0.0
    %117 = vmatprep.mubr.f32.mxu0 0.0
    %v118 = vand.u32 %v47, 4294901760
    %v119 = vsub.f32 %v47, %v118
    %v120 = vand.u32 %v119, 4294901760
    %v121 = vsub.f32 %v119, %v120
    %v122 = vand.u32 %v121, 4294901760
    %123 = vmatmul.mubr.f32.gmra.mxu0 %v122
    %v124 = vpop.f32.mrf.mxu0
    %v125 = vadd.f32 %v43, %v124
    %v126 = vpop.f32.mrf.mxu0
    %127 = vdwg.mxu0
    %128 = vmatprep.subr.mxu0 0.0
    %129 = vmatpush1.msra.mxu0 0.0
    %130 = vmatprep.subr.mxu0 0.0
    %131 = vmatpush1.msra.mxu0 0.0
    %132 = vmatprep.subr.mxu0 0.0
    %133 = vmatpush1.msra.mxu0 0.0
    %134 = vmatprep.subr.mxu0 0.0
    %135 = vmatpush1.msra.mxu0 0.0
    %136 = vmatprep.subr.mxu0 0.0
    %137 = vmatpush1.msra.mxu0 0.0
    %138 = vmatprep.subr.mxu0 0.0
    %139 = vmatpush1.msra.mxu0 0.0
    %140 = vmatprep.subr.mxu0 0.0
    %141 = vmatpush1.msra.mxu0 0.0
    %142 = vmatprep.subr.mxu0 0.0
    %143 = vmatpush1.msra.mxu0 0.0
    %144 = vmatprep.subr.mxu0 0.0
    %145 = vmatpush1.msra.mxu0 0.0
    %146 = vmatprep.subr.mxu0 0.0
    %147 = vmatpush1.msra.mxu0 0.0
    %148 = vmatprep.subr.mxu0 0.0
    %149 = vmatpush1.msra.mxu0 0.0
    %150 = vmatprep.subr.mxu0 0.0
    %151 = vmatpush1.msra.mxu0 0.0
    %152 = vmatprep.subr.mxu0 0.0
    %v153 = vand.u32 %v37, 4294901760
    %v154 = vsub.f32 %v37, %v153
    %v155 = vand.u32 %v154, 4294901760
    %v156 = vsub.f32 %v154, %v155
    %v157 = vand.u32 %v156, 4294901760
    %158 = vmatpush1.msra.mxu0 %v157
    %159 = vmatprep.subr.mxu0 0.0
    %v160 = vand.u32 %v36, 4294901760
    %v161 = vsub.f32 %v36, %v160
    %v162 = vand.u32 %v161, 4294901760
    %v163 = vsub.f32 %v161, %v162
    %v164 = vand.u32 %v163, 4294901760
    %165 = vmatpush1.msra.mxu0 %v164
    %166 = vmatprep.subr.mxu0 0.0
    %v167 = vand.u32 %v35, 4294901760
    %v168 = vsub.f32 %v35, %v167
    %v169 = vand.u32 %v168, 4294901760
    %v170 = vsub.f32 %v168, %v169
    %v171 = vand.u32 %v170, 4294901760
    %172 = vmatpush1.msra.mxu0 %v171
    %173 = vmatprep.subr.mxu0 0.0
    %v174 = vand.u32 %v34, 4294901760
    %v175 = vsub.f32 %v34, %v174
    %v176 = vand.u32 %v175, 4294901760
    %v177 = vsub.f32 %v175, %v176
    %v178 = vand.u32 %v177, 4294901760
    %179 = vmatpush1.msra.mxu0 %v178
    %180 = vmatprep.subr.mxu0 0.0
    %181 = vmatpush2.msra.mxu0 0.0
    %182 = vmatprep.subr.mxu0 0.0
    %183 = vmatpush2.msra.mxu0 0.0
    %184 = vmatprep.subr.mxu0 0.0
    %185 = vmatpush2.msra.mxu0 0.0
    %186 = vmatprep.subr.mxu0 0.0
    %187 = vmatpush2.msra.mxu0 0.0
    %188 = vmatprep.subr.mxu0 0.0
    %189 = vmatpush2.msra.mxu0 0.0
    %190 = vmatprep.subr.mxu0 0.0
    %191 = vmatpush2.msra.mxu0 0.0
    %192 = vmatprep.subr.mxu0 0.0
    %193 = vmatpush2.msra.mxu0 0.0
    %194 = vmatprep.subr.mxu0 0.0
    %195 = vmatpush2.msra.mxu0 0.0
    %196 = vmatprep.subr.mxu0 0.0
    %197 = vmatpush2.msra.mxu0 0.0
    %198 = vmatprep.subr.mxu0 0.0
    %199 = vmatpush2.msra.mxu0 0.0
    %200 = vmatprep.subr.mxu0 0.0
    %201 = vmatpush2.msra.mxu0 0.0
    %202 = vmatprep.subr.mxu0 0.0
    %203 = vmatpush2.msra.mxu0 0.0
    %204 = vmatprep.subr.mxu0 0.0
    %205 = vmatpush2.msra.mxu0 0.0
    %206 = vmatprep.subr.mxu0 0.0
    %207 = vmatpush2.msra.mxu0 0.0
    %208 = vmatprep.subr.mxu0 0.0
    %209 = vmatpush2.msra.mxu0 0.0
    %210 = vmatprep.subr.mxu0 0.0
    %211 = vmatpush2.msra.mxu0 0.0
    %212 = vmatprep.mubr.f32.mxu0 0.0
    %v213 = vand.u32 %v47, 4294901760
    %214 = vmatmul.mubr.f32.gmra.mxu0 %v213
    %v215 = vpop.f32.mrf.mxu0
    %v216 = vadd.f32 %v125, %v215
    %v217 = vpop.f32.mrf.mxu0
    %218 = vdwg.mxu0
    %219 = vmatprep.subr.mxu0 0.0
    %220 = vmatpush1.msra.mxu0 0.0
    %221 = vmatprep.subr.mxu0 0.0
    %222 = vmatpush1.msra.mxu0 0.0
    %223 = vmatprep.subr.mxu0 0.0
    %224 = vmatpush1.msra.mxu0 0.0
    %225 = vmatprep.subr.mxu0 0.0
    %226 = vmatpush1.msra.mxu0 0.0
    %227 = vmatprep.subr.mxu0 0.0
    %228 = vmatpush1.msra.mxu0 0.0
    %229 = vmatprep.subr.mxu0 0.0
    %230 = vmatpush1.msra.mxu0 0.0
    %231 = vmatprep.subr.mxu0 0.0
    %232 = vmatpush1.msra.mxu0 0.0
    %233 = vmatprep.subr.mxu0 0.0
    %234 = vmatpush1.msra.mxu0 0.0
    %235 = vmatprep.subr.mxu0 0.0
    %236 = vmatpush1.msra.mxu0 0.0
    %237 = vmatprep.subr.mxu0 0.0
    %238 = vmatpush1.msra.mxu0 0.0
    %239 = vmatprep.subr.mxu0 0.0
    %240 = vmatpush1.msra.mxu0 0.0
    %241 = vmatprep.subr.mxu0 0.0
    %242 = vmatpush1.msra.mxu0 0.0
    %243 = vmatprep.subr.mxu0 0.0
    %v244 = vand.u32 %v37, 4294901760
    %v245 = vsub.f32 %v37, %v244
    %246 = vmatpush1.msra.mxu0 %v245
    %247 = vmatprep.subr.mxu0 0.0
    %v248 = vand.u32 %v36, 4294901760
    %v249 = vsub.f32 %v36, %v248
    %250 = vmatpush1.msra.mxu0 %v249
    %251 = vmatprep.subr.mxu0 0.0
    %v252 = vand.u32 %v35, 4294901760
    %v253 = vsub.f32 %v35, %v252
    %254 = vmatpush1.msra.mxu0 %v253
    %255 = vmatprep.subr.mxu0 0.0
    %v256 = vand.u32 %v34, 4294901760
    %v257 = vsub.f32 %v34, %v256
    %258 = vmatpush1.msra.mxu0 %v257
    %259 = vmatprep.subr.mxu0 0.0
    %260 = vmatpush2.msra.mxu0 0.0
    %261 = vmatprep.subr.mxu0 0.0
    %262 = vmatpush2.msra.mxu0 0.0
    %263 = vmatprep.subr.mxu0 0.0
    %264 = vmatpush2.msra.mxu0 0.0
    %265 = vmatprep.subr.mxu0 0.0
    %266 = vmatpush2.msra.mxu0 0.0
    %267 = vmatprep.subr.mxu0 0.0
    %268 = vmatpush2.msra.mxu0 0.0
    %269 = vmatprep.subr.mxu0 0.0
    %270 = vmatpush2.msra.mxu0 0.0
    %271 = vmatprep.subr.mxu0 0.0
    %272 = vmatpush2.msra.mxu0 0.0
    %273 = vmatprep.subr.mxu0 0.0
    %274 = vmatpush2.msra.mxu0 0.0
    %275 = vmatprep.subr.mxu0 0.0
    %276 = vmatpush2.msra.mxu0 0.0
    %277 = vmatprep.subr.mxu0 0.0
    %278 = vmatpush2.msra.mxu0 0.0
    %279 = vmatprep.subr.mxu0 0.0
    %280 = vmatpush2.msra.mxu0 0.0
    %281 = vmatprep.subr.mxu0 0.0
    %282 = vmatpush2.msra.mxu0 0.0
    %283 = vmatprep.subr.mxu0 0.0
    %284 = vmatpush2.msra.mxu0 0.0
    %285 = vmatprep.subr.mxu0 0.0
    %286 = vmatpush2.msra.mxu0 0.0
    %287 = vmatprep.subr.mxu0 0.0
    %288 = vmatpush2.msra.mxu0 0.0
    %289 = vmatprep.subr.mxu0 0.0
    %290 = vmatpush2.msra.mxu0 0.0
    %291 = vmatprep.mubr.f32.mxu0 0.0
    %v292 = vand.u32 %v47, 4294901760
    %v293 = vsub.f32 %v47, %v292
    %294 = vmatmul.mubr.f32.gmra.mxu0 %v293
    %v295 = vpop.f32.mrf.mxu0
    %v296 = vadd.f32 %v216, %v295
    %v297 = vpop.f32.mrf.mxu0
    %298 = vdwg.mxu0
    %299 = vmatprep.subr.mxu0 0.0
    %300 = vmatpush1.msra.mxu0 0.0
    %301 = vmatprep.subr.mxu0 0.0
    %302 = vmatpush1.msra.mxu0 0.0
    %303 = vmatprep.subr.mxu0 0.0
    %304 = vmatpush1.msra.mxu0 0.0
    %305 = vmatprep.subr.mxu0 0.0
    %306 = vmatpush1.msra.mxu0 0.0
    %307 = vmatprep.subr.mxu0 0.0
    %308 = vmatpush1.msra.mxu0 0.0
    %309 = vmatprep.subr.mxu0 0.0
    %310 = vmatpush1.msra.mxu0 0.0
    %311 = vmatprep.subr.mxu0 0.0
    %312 = vmatpush1.msra.mxu0 0.0
    %313 = vmatprep.subr.mxu0 0.0
    %314 = vmatpush1.msra.mxu0 0.0
    %315 = vmatprep.subr.mxu0 0.0
    %316 = vmatpush1.msra.mxu0 0.0
    %317 = vmatprep.subr.mxu0 0.0
    %318 = vmatpush1.msra.mxu0 0.0
    %319 = vmatprep.subr.mxu0 0.0
    %320 = vmatpush1.msra.mxu0 0.0
    %321 = vmatprep.subr.mxu0 0.0
    %322 = vmatpush1.msra.mxu0 0.0
    %323 = vmatprep.subr.mxu0 0.0
    %v324 = vand.u32 %v37, 4294901760
    %325 = vmatpush1.msra.mxu0 %v324
    %326 = vmatprep.subr.mxu0 0.0
    %v327 = vand.u32 %v36, 4294901760
    %328 = vmatpush1.msra.mxu0 %v327
    %329 = vmatprep.subr.mxu0 0.0
    %v330 = vand.u32 %v35, 4294901760
    %331 = vmatpush1.msra.mxu0 %v330
    %332 = vmatprep.subr.mxu0 0.0
    %v333 = vand.u32 %v34, 4294901760
    %334 = vmatpush1.msra.mxu0 %v333
    %335 = vmatprep.subr.mxu0 0.0
    %336 = vmatpush2.msra.mxu0 0.0
    %337 = vmatprep.subr.mxu0 0.0
    %338 = vmatpush2.msra.mxu0 0.0
    %339 = vmatprep.subr.mxu0 0.0
    %340 = vmatpush2.msra.mxu0 0.0
    %341 = vmatprep.subr.mxu0 0.0
    %342 = vmatpush2.msra.mxu0 0.0
    %343 = vmatprep.subr.mxu0 0.0
    %344 = vmatpush2.msra.mxu0 0.0
    %345 = vmatprep.subr.mxu0 0.0
    %346 = vmatpush2.msra.mxu0 0.0
    %347 = vmatprep.subr.mxu0 0.0
    %348 = vmatpush2.msra.mxu0 0.0
    %349 = vmatprep.subr.mxu0 0.0
    %350 = vmatpush2.msra.mxu0 0.0
    %351 = vmatprep.subr.mxu0 0.0
    %352 = vmatpush2.msra.mxu0 0.0
    %353 = vmatprep.subr.mxu0 0.0
    %354 = vmatpush2.msra.mxu0 0.0
    %355 = vmatprep.subr.mxu0 0.0
    %356 = vmatpush2.msra.mxu0 0.0
    %357 = vmatprep.subr.mxu0 0.0
    %358 = vmatpush2.msra.mxu0 0.0
    %359 = vmatprep.subr.mxu0 0.0
    %360 = vmatpush2.msra.mxu0 0.0
    %361 = vmatprep.subr.mxu0 0.0
    %362 = vmatpush2.msra.mxu0 0.0
    %363 = vmatprep.subr.mxu0 0.0
    %364 = vmatpush2.msra.mxu0 0.0
    %365 = vmatprep.subr.mxu0 0.0
    %366 = vmatpush2.msra.mxu0 0.0
    %367 = vmatprep.mubr.f32.mxu0 0.0
    %v368 = vand.u32 %v47, 4294901760
    %v369 = vsub.f32 %v47, %v368
    %v370 = vand.u32 %v369, 4294901760
    %371 = vmatmul.mubr.f32.gmra.mxu0 %v370
    %v372 = vpop.f32.mrf.mxu0
    %v373 = vadd.f32 %v296, %v372
    %v374 = vpop.f32.mrf.mxu0
    %375 = vdwg.mxu0
    %376 = vmatprep.subr.mxu0 0.0
    %377 = vmatpush1.msra.mxu0 0.0
    %378 = vmatprep.subr.mxu0 0.0
    %379 = vmatpush1.msra.mxu0 0.0
    %380 = vmatprep.subr.mxu0 0.0
    %381 = vmatpush1.msra.mxu0 0.0
    %382 = vmatprep.subr.mxu0 0.0
    %383 = vmatpush1.msra.mxu0 0.0
    %384 = vmatprep.subr.mxu0 0.0
    %385 = vmatpush1.msra.mxu0 0.0
    %386 = vmatprep.subr.mxu0 0.0
    %387 = vmatpush1.msra.mxu0 0.0
    %388 = vmatprep.subr.mxu0 0.0
    %389 = vmatpush1.msra.mxu0 0.0
    %390 = vmatprep.subr.mxu0 0.0
    %391 = vmatpush1.msra.mxu0 0.0
    %392 = vmatprep.subr.mxu0 0.0
    %393 = vmatpush1.msra.mxu0 0.0
    %394 = vmatprep.subr.mxu0 0.0
    %395 = vmatpush1.msra.mxu0 0.0
    %396 = vmatprep.subr.mxu0 0.0
    %397 = vmatpush1.msra.mxu0 0.0
    %398 = vmatprep.subr.mxu0 0.0
    %399 = vmatpush1.msra.mxu0 0.0
    %400 = vmatprep.subr.mxu0 0.0
    %v401 = vand.u32 %v37, 4294901760
    %v402 = vsub.f32 %v37, %v401
    %v403 = vand.u32 %v402, 4294901760
    %404 = vmatpush1.msra.mxu0 %v403
    %405 = vmatprep.subr.mxu0 0.0
    %v406 = vand.u32 %v36, 4294901760
    %v407 = vsub.f32 %v36, %v406
    %v408 = vand.u32 %v407, 4294901760
    %409 = vmatpush1.msra.mxu0 %v408
    %410 = vmatprep.subr.mxu0 0.0
    %v411 = vand.u32 %v35, 4294901760
    %v412 = vsub.f32 %v35, %v411
    %v413 = vand.u32 %v412, 4294901760
    %414 = vmatpush1.msra.mxu0 %v413
    %415 = vmatprep.subr.mxu0 0.0
    %v416 = vand.u32 %v34, 4294901760
    %v417 = vsub.f32 %v34, %v416
    %v418 = vand.u32 %v417, 4294901760
    %419 = vmatpush1.msra.mxu0 %v418
    %420 = vmatprep.subr.mxu0 0.0
    %421 = vmatpush2.msra.mxu0 0.0
    %422 = vmatprep.subr.mxu0 0.0
    %423 = vmatpush2.msra.mxu0 0.0
    %424 = vmatprep.subr.mxu0 0.0
    %425 = vmatpush2.msra.mxu0 0.0
    %426 = vmatprep.subr.mxu0 0.0
    %427 = vmatpush2.msra.mxu0 0.0
    %428 = vmatprep.subr.mxu0 0.0
    %429 = vmatpush2.msra.mxu0 0.0
    %430 = vmatprep.subr.mxu0 0.0
    %431 = vmatpush2.msra.mxu0 0.0
    %432 = vmatprep.subr.mxu0 0.0
    %433 = vmatpush2.msra.mxu0 0.0
    %434 = vmatprep.subr.mxu0 0.0
    %435 = vmatpush2.msra.mxu0 0.0
    %436 = vmatprep.subr.mxu0 0.0
    %437 = vmatpush2.msra.mxu0 0.0
    %438 = vmatprep.subr.mxu0 0.0
    %439 = vmatpush2.msra.mxu0 0.0
    %440 = vmatprep.subr.mxu0 0.0
    %441 = vmatpush2.msra.mxu0 0.0
    %442 = vmatprep.subr.mxu0 0.0
    %443 = vmatpush2.msra.mxu0 0.0
    %444 = vmatprep.subr.mxu0 0.0
    %445 = vmatpush2.msra.mxu0 0.0
    %446 = vmatprep.subr.mxu0 0.0
    %447 = vmatpush2.msra.mxu0 0.0
    %448 = vmatprep.subr.mxu0 0.0
    %449 = vmatpush2.msra.mxu0 0.0
    %450 = vmatprep.subr.mxu0 0.0
    %451 = vmatpush2.msra.mxu0 0.0
    %452 = vmatprep.mubr.f32.mxu0 0.0
    %v453 = vand.u32 %v47, 4294901760
    %454 = vmatmul.mubr.f32.gmra.mxu0 %v453
    %v455 = vpop.f32.mrf.mxu0
    %v456 = vadd.f32 %v373, %v455
    %v457 = vpop.f32.mrf.mxu0
    %458 = vdwg.mxu0
    %459 = vmatprep.subr.mxu0 0.0
    %460 = vmatpush1.msra.mxu0 0.0
    %461 = vmatprep.subr.mxu0 0.0
    %462 = vmatpush1.msra.mxu0 0.0
    %463 = vmatprep.subr.mxu0 0.0
    %464 = vmatpush1.msra.mxu0 0.0
    %465 = vmatprep.subr.mxu0 0.0
    %466 = vmatpush1.msra.mxu0 0.0
    %467 = vmatprep.subr.mxu0 0.0
    %468 = vmatpush1.msra.mxu0 0.0
    %469 = vmatprep.subr.mxu0 0.0
    %470 = vmatpush1.msra.mxu0 0.0
    %471 = vmatprep.subr.mxu0 0.0
    %472 = vmatpush1.msra.mxu0 0.0
    %473 = vmatprep.subr.mxu0 0.0
    %474 = vmatpush1.msra.mxu0 0.0
    %475 = vmatprep.subr.mxu0 0.0
    %476 = vmatpush1.msra.mxu0 0.0
    %477 = vmatprep.subr.mxu0 0.0
    %478 = vmatpush1.msra.mxu0 0.0
    %479 = vmatprep.subr.mxu0 0.0
    %480 = vmatpush1.msra.mxu0 0.0
    %481 = vmatprep.subr.mxu0 0.0
    %482 = vmatpush1.msra.mxu0 0.0
    %483 = vmatprep.subr.mxu0 0.0
    %v484 = vand.u32 %v37, 4294901760
    %485 = vmatpush1.msra.mxu0 %v484
    %486 = vmatprep.subr.mxu0 0.0
    %v487 = vand.u32 %v36, 4294901760
    %488 = vmatpush1.msra.mxu0 %v487
    %489 = vmatprep.subr.mxu0 0.0
    %v490 = vand.u32 %v35, 4294901760
    %491 = vmatpush1.msra.mxu0 %v490
    %492 = vmatprep.subr.mxu0 0.0
    %v493 = vand.u32 %v34, 4294901760
    %494 = vmatpush1.msra.mxu0 %v493
    %495 = vmatprep.subr.mxu0 0.0
    %496 = vmatpush2.msra.mxu0 0.0
    %497 = vmatprep.subr.mxu0 0.0
    %498 = vmatpush2.msra.mxu0 0.0
    %499 = vmatprep.subr.mxu0 0.0
    %500 = vmatpush2.msra.mxu0 0.0
    %501 = vmatprep.subr.mxu0 0.0
    %502 = vmatpush2.msra.mxu0 0.0
    %503 = vmatprep.subr.mxu0 0.0
    %504 = vmatpush2.msra.mxu0 0.0
    %505 = vmatprep.subr.mxu0 0.0
    %506 = vmatpush2.msra.mxu0 0.0
    %507 = vmatprep.subr.mxu0 0.0
    %508 = vmatpush2.msra.mxu0 0.0
    %509 = vmatprep.subr.mxu0 0.0
    %510 = vmatpush2.msra.mxu0 0.0
    %511 = vmatprep.subr.mxu0 0.0
    %512 = vmatpush2.msra.mxu0 0.0
    %513 = vmatprep.subr.mxu0 0.0
    %514 = vmatpush2.msra.mxu0 0.0
    %515 = vmatprep.subr.mxu0 0.0
    %516 = vmatpush2.msra.mxu0 0.0
    %517 = vmatprep.subr.mxu0 0.0
    %518 = vmatpush2.msra.mxu0 0.0
    %519 = vmatprep.subr.mxu0 0.0
    %520 = vmatpush2.msra.mxu0 0.0
    %521 = vmatprep.subr.mxu0 0.0
    %522 = vmatpush2.msra.mxu0 0.0
    %523 = vmatprep.subr.mxu0 0.0
    %524 = vmatpush2.msra.mxu0 0.0
    %525 = vmatprep.subr.mxu0 0.0
    %526 = vmatpush2.msra.mxu0 0.0
    %527 = vmatprep.mubr.f32.mxu0 0.0
    %v528 = vand.u32 %v47, 4294901760
    %529 = vmatmul.mubr.f32.gmra.mxu0 %v528
    %v530 = vpop.f32.mrf.mxu0
    %v531 = vadd.f32 %v456, %v530
    %v532 = vpop.f32.mrf.mxu0
    %533 = vdwg.mxu0
    %v534 = vmax.f32 %v531, 0.0
    %v535 = vld [vmem:[%s3] sm:$0xff]
    %v536 = vld [vmem:[%s3 + $0x8] sm:$0xff]
    %v537 = vld [vmem:[%s3 + $0x10] sm:$0xff]
    %v538 = vld [vmem:[%s3 + $0x18] sm:$0xff]
    %v539 = vld [vmem:[%s3 + $0x20] sm:$0xff]
    %v540 = vld [vmem:[%s3 + $0x28] sm:$0xff]
    %v541 = vld [vmem:[%s3 + $0x30] sm:$0xff]
    %v542 = vld [vmem:[%s3 + $0x38] sm:$0xff]
    %v543 = vld [vmem:[%s4] sm:$0x1]
    %v545 = vlaneseq
    %v546 = vshrl.u32 %v545, 7
    %v547 = vsub.s32 0, %v546
    %v548 = vrot.slane %v543, %v547
    %vm550 = vcmask 523264
    %v552 = vsel %vm550, %v534, 0
    %554 = vmatprep.subr.mxu0 0.0
    %555 = vmatpush1.msra.mxu0 0.0
    %556 = vmatprep.subr.mxu0 0.0
    %557 = vmatpush1.msra.mxu0 0.0
    %558 = vmatprep.subr.mxu0 0.0
    %559 = vmatpush1.msra.mxu0 0.0
    %560 = vmatprep.subr.mxu0 0.0
    %561 = vmatpush1.msra.mxu0 0.0
    %562 = vmatprep.subr.mxu0 0.0
    %563 = vmatpush1.msra.mxu0 0.0
    %564 = vmatprep.subr.mxu0 0.0
    %565 = vmatpush1.msra.mxu0 0.0
    %566 = vmatprep.subr.mxu0 0.0
    %567 = vmatpush1.msra.mxu0 0.0
    %568 = vmatprep.subr.mxu0 0.0
    %569 = vmatpush1.msra.mxu0 0.0
    %570 = vmatprep.subr.mxu0 0.0
    %v571 = vand.u32 %v542, 4294901760
    %572 = vmatpush1.msra.mxu0 %v571
    %573 = vmatprep.subr.mxu0 0.0
    %v574 = vand.u32 %v541, 4294901760
    %575 = vmatpush1.msra.mxu0 %v574
    %576 = vmatprep.subr.mxu0 0.0
    %v577 = vand.u32 %v540, 4294901760
    %578 = vmatpush1.msra.mxu0 %v577
    %579 = vmatprep.subr.mxu0 0.0
    %v580 = vand.u32 %v539, 4294901760
    %581 = vmatpush1.msra.mxu0 %v580
    %582 = vmatprep.subr.mxu0 0.0
    %v583 = vand.u32 %v538, 4294901760
    %584 = vmatpush1.msra.mxu0 %v583
    %585 = vmatprep.subr.mxu0 0.0
    %v586 = vand.u32 %v537, 4294901760
    %587 = vmatpush1.msra.mxu0 %v586
    %588 = vmatprep.subr.mxu0 0.0
    %v589 = vand.u32 %v536, 4294901760
    %590 = vmatpush1.msra.mxu0 %v589
    %591 = vmatprep.subr.mxu0 0.0
    %v592 = vand.u32 %v535, 4294901760
    %593 = vmatpush1.msra.mxu0 %v592
    %594 = vmatprep.subr.mxu0 0.0
    %595 = vmatpush2.msra.mxu0 0.0
    %596 = vmatprep.subr.mxu0 0.0
    %597 = vmatpush2.msra.mxu0 0.0
    %598 = vmatprep.subr.mxu0 0.0
    %599 = vmatpush2.msra.mxu0 0.0
    %600 = vmatprep.subr.mxu0 0.0
    %601 = vmatpush2.msra.mxu0 0.0
    %602 = vmatprep.subr.mxu0 0.0
    %603 = vmatpush2.msra.mxu0 0.0
    %604 = vmatprep.subr.mxu0 0.0
    %605 = vmatpush2.msra.mxu0 0.0
    %606 = vmatprep.subr.mxu0 0.0
    %607 = vmatpush2.msra.mxu0 0.0
    %608 = vmatprep.subr.mxu0 0.0
    %609 = vmatpush2.msra.mxu0 0.0
    %610 = vmatprep.subr.mxu0 0.0
    %611 = vmatpush2.msra.mxu0 0.0
    %612 = vmatprep.subr.mxu0 0.0
    %613 = vmatpush2.msra.mxu0 0.0
    %614 = vmatprep.subr.mxu0 0.0
    %615 = vmatpush2.msra.mxu0 0.0
    %616 = vmatprep.subr.mxu0 0.0
    %617 = vmatpush2.msra.mxu0 0.0
    %618 = vmatprep.subr.mxu0 0.0
    %619 = vmatpush2.msra.mxu0 0.0
    %620 = vmatprep.subr.mxu0 0.0
    %621 = vmatpush2.msra.mxu0 0.0
    %622 = vmatprep.subr.mxu0 0.0
    %623 = vmatpush2.msra.mxu0 0.0
    %624 = vmatprep.subr.mxu0 0.0
    %625 = vmatpush2.msra.mxu0 0.0
    %626 = vmatprep.mubr.f32.mxu0 0.0
    %v627 = vand.u32 %v552, 4294901760
    %v628 = vsub.f32 %v552, %v627
    %v629 = vand.u32 %v628, 4294901760
    %v630 = vsub.f32 %v628, %v629
    %v631 = vand.u32 %v630, 4294901760
    %632 = vmatmul.mubr.f32.gmra.mxu0 %v631
    %v633 = vpop.f32.mrf.mxu0
    %v634 = vadd.f32 %v548, %v633
    %v635 = vpop.f32.mrf.mxu0
    %636 = vdwg.mxu0
    %637 = vmatprep.subr.mxu0 0.0
    %638 = vmatpush1.msra.mxu0 0.0
    %639 = vmatprep.subr.mxu0 0.0
    %640 = vmatpush1.msra.mxu0 0.0
    %641 = vmatprep.subr.mxu0 0.0
    %642 = vmatpush1.msra.mxu0 0.0
    %643 = vmatprep.subr.mxu0 0.0
    %644 = vmatpush1.msra.mxu0 0.0
    %645 = vmatprep.subr.mxu0 0.0
    %646 = vmatpush1.msra.mxu0 0.0
    %647 = vmatprep.subr.mxu0 0.0
    %648 = vmatpush1.msra.mxu0 0.0
    %649 = vmatprep.subr.mxu0 0.0
    %650 = vmatpush1.msra.mxu0 0.0
    %651 = vmatprep.subr.mxu0 0.0
    %652 = vmatpush1.msra.mxu0 0.0
    %653 = vmatprep.subr.mxu0 0.0
    %v654 = vand.u32 %v542, 4294901760
    %v655 = vsub.f32 %v542, %v654
    %v656 = vand.u32 %v655, 4294901760
    %v657 = vsub.f32 %v655, %v656
    %v658 = vand.u32 %v657, 4294901760
    %659 = vmatpush1.msra.mxu0 %v658
    %660 = vmatprep.subr.mxu0 0.0
    %v661 = vand.u32 %v541, 4294901760
    %v662 = vsub.f32 %v541, %v661
    %v663 = vand.u32 %v662, 4294901760
    %v664 = vsub.f32 %v662, %v663
    %v665 = vand.u32 %v664, 4294901760
    %666 = vmatpush1.msra.mxu0 %v665
    %667 = vmatprep.subr.mxu0 0.0
    %v668 = vand.u32 %v540, 4294901760
    %v669 = vsub.f32 %v540, %v668
    %v670 = vand.u32 %v669, 4294901760
    %v671 = vsub.f32 %v669, %v670
    %v672 = vand.u32 %v671, 4294901760
    %673 = vmatpush1.msra.mxu0 %v672
    %674 = vmatprep.subr.mxu0 0.0
    %v675 = vand.u32 %v539, 4294901760
    %v676 = vsub.f32 %v539, %v675
    %v677 = vand.u32 %v676, 4294901760
    %v678 = vsub.f32 %v676, %v677
    %v679 = vand.u32 %v678, 4294901760
    %680 = vmatpush1.msra.mxu0 %v679
    %681 = vmatprep.subr.mxu0 0.0
    %v682 = vand.u32 %v538, 4294901760
    %v683 = vsub.f32 %v538, %v682
    %v684 = vand.u32 %v683, 4294901760
    %v685 = vsub.f32 %v683, %v684
    %v686 = vand.u32 %v685, 4294901760
    %687 = vmatpush1.msra.mxu0 %v686
    %688 = vmatprep.subr.mxu0 0.0
    %v689 = vand.u32 %v537, 4294901760
    %v690 = vsub.f32 %v537, %v689
    %v691 = vand.u32 %v690, 4294901760
    %v692 = vsub.f32 %v690, %v691
    %v693 = vand.u32 %v692, 4294901760
    %694 = vmatpush1.msra.mxu0 %v693
    %695 = vmatprep.subr.mxu0 0.0
    %v696 = vand.u32 %v536, 4294901760
    %v697 = vsub.f32 %v536, %v696
    %v698 = vand.u32 %v697, 4294901760
    %v699 = vsub.f32 %v697, %v698
    %v700 = vand.u32 %v699, 4294901760
    %701 = vmatpush1.msra.mxu0 %v700
    %702 = vmatprep.subr.mxu0 0.0
    %v703 = vand.u32 %v535, 4294901760
    %v704 = vsub.f32 %v535, %v703
    %v705 = vand.u32 %v704, 4294901760
    %v706 = vsub.f32 %v704, %v705
    %v707 = vand.u32 %v706, 4294901760
    %708 = vmatpush1.msra.mxu0 %v707
    %709 = vmatprep.subr.mxu0 0.0
    %710 = vmatpush2.msra.mxu0 0.0
    %711 = vmatprep.subr.mxu0 0.0
    %712 = vmatpush2.msra.mxu0 0.0
    %713 = vmatprep.subr.mxu0 0.0
    %714 = vmatpush2.msra.mxu0 0.0
    %715 = vmatprep.subr.mxu0 0.0
    %716 = vmatpush2.msra.mxu0 0.0
    %717 = vmatprep.subr.mxu0 0.0
    %718 = vmatpush2.msra.mxu0 0.0
    %719 = vmatprep.subr.mxu0 0.0
    %720 = vmatpush2.msra.mxu0 0.0
    %721 = vmatprep.subr.mxu0 0.0
    %722 = vmatpush2.msra.mxu0 0.0
    %723 = vmatprep.subr.mxu0 0.0
    %724 = vmatpush2.msra.mxu0 0.0
    %725 = vmatprep.subr.mxu0 0.0
    %726 = vmatpush2.msra.mxu0 0.0
    %727 = vmatprep.subr.mxu0 0.0
    %728 = vmatpush2.msra.mxu0 0.0
    %729 = vmatprep.subr.mxu0 0.0
    %730 = vmatpush2.msra.mxu0 0.0
    %731 = vmatprep.subr.mxu0 0.0
    %732 = vmatpush2.msra.mxu0 0.0
    %733 = vmatprep.subr.mxu0 0.0
    %734 = vmatpush2.msra.mxu0 0.0
    %735 = vmatprep.subr.mxu0 0.0
    %736 = vmatpush2.msra.mxu0 0.0
    %737 = vmatprep.subr.mxu0 0.0
    %738 = vmatpush2.msra.mxu0 0.0
    %739 = vmatprep.subr.mxu0 0.0
    %740 = vmatpush2.msra.mxu0 0.0
    %741 = vmatprep.mubr.f32.mxu0 0.0
    %v742 = vand.u32 %v552, 4294901760
    %743 = vmatmul.mubr.f32.gmra.mxu0 %v742
    %v744 = vpop.f32.mrf.mxu0
    %v745 = vadd.f32 %v634, %v744
    %v746 = vpop.f32.mrf.mxu0
    %747 = vdwg.mxu0
    %748 = vmatprep.subr.mxu0 0.0
    %749 = vmatpush1.msra.mxu0 0.0
    %750 = vmatprep.subr.mxu0 0.0
    %751 = vmatpush1.msra.mxu0 0.0
    %752 = vmatprep.subr.mxu0 0.0
    %753 = vmatpush1.msra.mxu0 0.0
    %754 = vmatprep.subr.mxu0 0.0
    %755 = vmatpush1.msra.mxu0 0.0
    %756 = vmatprep.subr.mxu0 0.0
    %757 = vmatpush1.msra.mxu0 0.0
    %758 = vmatprep.subr.mxu0 0.0
    %759 = vmatpush1.msra.mxu0 0.0
    %760 = vmatprep.subr.mxu0 0.0
    %761 = vmatpush1.msra.mxu0 0.0
    %762 = vmatprep.subr.mxu0 0.0
    %763 = vmatpush1.msra.mxu0 0.0
    %764 = vmatprep.subr.mxu0 0.0
    %v765 = vand.u32 %v542, 4294901760
    %v766 = vsub.f32 %v542, %v765
    %767 = vmatpush1.msra.mxu0 %v766
    %768 = vmatprep.subr.mxu0 0.0
    %v769 = vand.u32 %v541, 4294901760
    %v770 = vsub.f32 %v541, %v769
    %771 = vmatpush1.msra.mxu0 %v770
    %772 = vmatprep.subr.mxu0 0.0
    %v773 = vand.u32 %v540, 4294901760
    %v774 = vsub.f32 %v540, %v773
    %775 = vmatpush1.msra.mxu0 %v774
    %776 = vmatprep.subr.mxu0 0.0
    %v777 = vand.u32 %v539, 4294901760
    %v778 = vsub.f32 %v539, %v777
    %779 = vmatpush1.msra.mxu0 %v778
    %780 = vmatprep.subr.mxu0 0.0
    %v781 = vand.u32 %v538, 4294901760
    %v782 = vsub.f32 %v538, %v781
    %783 = vmatpush1.msra.mxu0 %v782
    %784 = vmatprep.subr.mxu0 0.0
    %v785 = vand.u32 %v537, 4294901760
    %v786 = vsub.f32 %v537, %v785
    %787 = vmatpush1.msra.mxu0 %v786
    %788 = vmatprep.subr.mxu0 0.0
    %v789 = vand.u32 %v536, 4294901760
    %v790 = vsub.f32 %v536, %v789
    %791 = vmatpush1.msra.mxu0 %v790
    %792 = vmatprep.subr.mxu0 0.0
    %v793 = vand.u32 %v535, 4294901760
    %v794 = vsub.f32 %v535, %v793
    %795 = vmatpush1.msra.mxu0 %v794
    %796 = vmatprep.subr.mxu0 0.0
    %797 = vmatpush2.msra.mxu0 0.0
    %798 = vmatprep.subr.mxu0 0.0
    %799 = vmatpush2.msra.mxu0 0.0
    %800 = vmatprep.subr.mxu0 0.0
    %801 = vmatpush2.msra.mxu0 0.0
    %802 = vmatprep.subr.mxu0 0.0
    %803 = vmatpush2.msra.mxu0 0.0
    %804 = vmatprep.subr.mxu0 0.0
    %805 = vmatpush2.msra.mxu0 0.0
    %806 = vmatprep.subr.mxu0 0.0
    %807 = vmatpush2.msra.mxu0 0.0
    %808 = vmatprep.subr.mxu0 0.0
    %809 = vmatpush2.msra.mxu0 0.0
    %810 = vmatprep.subr.mxu0 0.0
    %811 = vmatpush2.msra.mxu0 0.0
    %812 = vmatprep.subr.mxu0 0.0
    %813 = vmatpush2.msra.mxu0 0.0
    %814 = vmatprep.subr.mxu0 0.0
    %815 = vmatpush2.msra.mxu0 0.0
    %816 = vmatprep.subr.mxu0 0.0
    %817 = vmatpush2.msra.mxu0 0.0
    %818 = vmatprep.subr.mxu0 0.0
    %819 = vmatpush2.msra.mxu0 0.0
    %820 = vmatprep.subr.mxu0 0.0
    %821 = vmatpush2.msra.mxu0 0.0
    %822 = vmatprep.subr.mxu0 0.0
    %823 = vmatpush2.msra.mxu0 0.0
    %824 = vmatprep.subr.mxu0 0.0
    %825 = vmatpush2.msra.mxu0 0.0
    %826 = vmatprep.subr.mxu0 0.0
    %827 = vmatpush2.msra.mxu0 0.0
    %828 = vmatprep.mubr.f32.mxu0 0.0
    %v829 = vand.u32 %v552, 4294901760
    %v830 = vsub.f32 %v552, %v829
    %831 = vmatmul.mubr.f32.gmra.mxu0 %v830
    %v832 = vpop.f32.mrf.mxu0
    %v833 = vadd.f32 %v745, %v832
    %v834 = vpop.f32.mrf.mxu0
    %835 = vdwg.mxu0
    %836 = vmatprep.subr.mxu0 0.0
    %837 = vmatpush1.msra.mxu0 0.0
    %838 = vmatprep.subr.mxu0 0.0
    %839 = vmatpush1.msra.mxu0 0.0
    %840 = vmatprep.subr.mxu0 0.0
    %841 = vmatpush1.msra.mxu0 0.0
    %842 = vmatprep.subr.mxu0 0.0
    %843 = vmatpush1.msra.mxu0 0.0
    %844 = vmatprep.subr.mxu0 0.0
    %845 = vmatpush1.msra.mxu0 0.0
    %846 = vmatprep.subr.mxu0 0.0
    %847 = vmatpush1.msra.mxu0 0.0
    %848 = vmatprep.subr.mxu0 0.0
    %849 = vmatpush1.msra.mxu0 0.0
    %850 = vmatprep.subr.mxu0 0.0
    %851 = vmatpush1.msra.mxu0 0.0
    %852 = vmatprep.subr.mxu0 0.0
    %v853 = vand.u32 %v542, 4294901760
    %854 = vmatpush1.msra.mxu0 %v853
    %855 = vmatprep.subr.mxu0 0.0
    %v856 = vand.u32 %v541, 4294901760
    %857 = vmatpush1.msra.mxu0 %v856
    %858 = vmatprep.subr.mxu0 0.0
    %v859 = vand.u32 %v540, 4294901760
    %860 = vmatpush1.msra.mxu0 %v859
    %861 = vmatprep.subr.mxu0 0.0
    %v862 = vand.u32 %v539, 4294901760
    %863 = vmatpush1.msra.mxu0 %v862
    %864 = vmatprep.subr.mxu0 0.0
    %v865 = vand.u32 %v538, 4294901760
    %866 = vmatpush1.msra.mxu0 %v865
    %867 = vmatprep.subr.mxu0 0.0
    %v868 = vand.u32 %v537, 4294901760
    %869 = vmatpush1.msra.mxu0 %v868
    %870 = vmatprep.subr.mxu0 0.0
    %v871 = vand.u32 %v536, 4294901760
    %872 = vmatpush1.msra.mxu0 %v871
    %873 = vmatprep.subr.mxu0 0.0
    %v874 = vand.u32 %v535, 4294901760
    %875 = vmatpush1.msra.mxu0 %v874
    %876 = vmatprep.subr.mxu0 0.0
    %877 = vmatpush2.msra.mxu0 0.0
    %878 = vmatprep.subr.mxu0 0.0
    %879 = vmatpush2.msra.mxu0 0.0
    %880 = vmatprep.subr.mxu0 0.0
    %881 = vmatpush2.msra.mxu0 0.0
    %882 = vmatprep.subr.mxu0 0.0
    %883 = vmatpush2.msra.mxu0 0.0
    %884 = vmatprep.subr.mxu0 0.0
    %885 = vmatpush2.msra.mxu0 0.0
    %886 = vmatprep.subr.mxu0 0.0
    %887 = vmatpush2.msra.mxu0 0.0
    %888 = vmatprep.subr.mxu0 0.0
    %889 = vmatpush2.msra.mxu0 0.0
    %890 = vmatprep.subr.mxu0 0.0
    %891 = vmatpush2.msra.mxu0 0.0
    %892 = vmatprep.subr.mxu0 0.0
    %893 = vmatpush2.msra.mxu0 0.0
    %894 = vmatprep.subr.mxu0 0.0
    %895 = vmatpush2.msra.mxu0 0.0
    %896 = vmatprep.subr.mxu0 0.0
    %897 = vmatpush2.msra.mxu0 0.0
    %898 = vmatprep.subr.mxu0 0.0
    %899 = vmatpush2.msra.mxu0 0.0
    %900 = vmatprep.subr.mxu0 0.0
    %901 = vmatpush2.msra.mxu0 0.0
    %902 = vmatprep.subr.mxu0 0.0
    %903 = vmatpush2.msra.mxu0 0.0
    %904 = vmatprep.subr.mxu0 0.0
    %905 = vmatpush2.msra.mxu0 0.0
    %906 = vmatprep.subr.mxu0 0.0
    %907 = vmatpush2.msra.mxu0 0.0
    %908 = vmatprep.mubr.f32.mxu0 0.0
    %v909 = vand.u32 %v552, 4294901760
    %v910 = vsub.f32 %v552, %v909
    %v911 = vand.u32 %v910, 4294901760
    %912 = vmatmul.mubr.f32.gmra.mxu0 %v911
    %v913 = vpop.f32.mrf.mxu0
    %v914 = vadd.f32 %v833, %v913
    %v915 = vpop.f32.mrf.mxu0
    %916 = vdwg.mxu0
    %917 = vmatprep.subr.mxu0 0.0
    %918 = vmatpush1.msra.mxu0 0.0
    %919 = vmatprep.subr.mxu0 0.0
    %920 = vmatpush1.msra.mxu0 0.0
    %921 = vmatprep.subr.mxu0 0.0
    %922 = vmatpush1.msra.mxu0 0.0
    %923 = vmatprep.subr.mxu0 0.0
    %924 = vmatpush1.msra.mxu0 0.0
    %925 = vmatprep.subr.mxu0 0.0
    %926 = vmatpush1.msra.mxu0 0.0
    %927 = vmatprep.subr.mxu0 0.0
    %928 = vmatpush1.msra.mxu0 0.0
    %929 = vmatprep.subr.mxu0 0.0
    %930 = vmatpush1.msra.mxu0 0.0
    %931 = vmatprep.subr.mxu0 0.0
    %932 = vmatpush1.msra.mxu0 0.0
    %933 = vmatprep.subr.mxu0 0.0
    %v934 = vand.u32 %v542, 4294901760
    %v935 = vsub.f32 %v542, %v934
    %v936 = vand.u32 %v935, 4294901760
    %937 = vmatpush1.msra.mxu0 %v936
    %938 = vmatprep.subr.mxu0 0.0
    %v939 = vand.u32 %v541, 4294901760
    %v940 = vsub.f32 %v541, %v939
    %v941 = vand.u32 %v940, 4294901760
    %942 = vmatpush1.msra.mxu0 %v941
    %943 = vmatprep.subr.mxu0 0.0
    %v944 = vand.u32 %v540, 4294901760
    %v945 = vsub.f32 %v540, %v944
    %v946 = vand.u32 %v945, 4294901760
    %947 = vmatpush1.msra.mxu0 %v946
    %948 = vmatprep.subr.mxu0 0.0
    %v949 = vand.u32 %v539, 4294901760
    %v950 = vsub.f32 %v539, %v949
    %v951 = vand.u32 %v950, 4294901760
    %952 = vmatpush1.msra.mxu0 %v951
    %953 = vmatprep.subr.mxu0 0.0
    %v954 = vand.u32 %v538, 4294901760
    %v955 = vsub.f32 %v538, %v954
    %v956 = vand.u32 %v955, 4294901760
    %957 = vmatpush1.msra.mxu0 %v956
    %958 = vmatprep.subr.mxu0 0.0
    %v959 = vand.u32 %v537, 4294901760
    %v960 = vsub.f32 %v537, %v959
    %v961 = vand.u32 %v960, 4294901760
    %962 = vmatpush1.msra.mxu0 %v961
    %963 = vmatprep.subr.mxu0 0.0
    %v964 = vand.u32 %v536, 4294901760
    %v965 = vsub.f32 %v536, %v964
    %v966 = vand.u32 %v965, 4294901760
    %967 = vmatpush1.msra.mxu0 %v966
    %968 = vmatprep.subr.mxu0 0.0
    %v969 = vand.u32 %v535, 4294901760
    %v970 = vsub.f32 %v535, %v969
    %v971 = vand.u32 %v970, 4294901760
    %972 = vmatpush1.msra.mxu0 %v971
    %973 = vmatprep.subr.mxu0 0.0
    %974 = vmatpush2.msra.mxu0 0.0
    %975 = vmatprep.subr.mxu0 0.0
    %976 = vmatpush2.msra.mxu0 0.0
    %977 = vmatprep.subr.mxu0 0.0
    %978 = vmatpush2.msra.mxu0 0.0
    %979 = vmatprep.subr.mxu0 0.0
    %980 = vmatpush2.msra.mxu0 0.0
    %981 = vmatprep.subr.mxu0 0.0
    %982 = vmatpush2.msra.mxu0 0.0
    %983 = vmatprep.subr.mxu0 0.0
    %984 = vmatpush2.msra.mxu0 0.0
    %985 = vmatprep.subr.mxu0 0.0
    %986 = vmatpush2.msra.mxu0 0.0
    %987 = vmatprep.subr.mxu0 0.0
    %988 = vmatpush2.msra.mxu0 0.0
    %989 = vmatprep.subr.mxu0 0.0
    %990 = vmatpush2.msra.mxu0 0.0
    %991 = vmatprep.subr.mxu0 0.0
    %992 = vmatpush2.msra.mxu0 0.0
    %993 = vmatprep.subr.mxu0 0.0
    %994 = vmatpush2.msra.mxu0 0.0
    %995 = vmatprep.subr.mxu0 0.0
    %996 = vmatpush2.msra.mxu0 0.0
    %997 = vmatprep.subr.mxu0 0.0
    %998 = vmatpush2.msra.mxu0 0.0
    %999 = vmatprep.subr.mxu0 0.0
    %1000 = vmatpush2.msra.mxu0 0.0
    %1001 = vmatprep.subr.mxu0 0.0
    %1002 = vmatpush2.msra.mxu0 0.0
    %1003 = vmatprep.subr.mxu0 0.0
    %1004 = vmatpush2.msra.mxu0 0.0
    %1005 = vmatprep.mubr.f32.mxu0 0.0
    %v1006 = vand.u32 %v552, 4294901760
    %1007 = vmatmul.mubr.f32.gmra.mxu0 %v1006
    %v1008 = vpop.f32.mrf.mxu0
    %v1009 = vadd.f32 %v914, %v1008
    %v1010 = vpop.f32.mrf.mxu0
    %1011 = vdwg.mxu0
    %1012 = vmatprep.subr.mxu0 0.0
    %1013 = vmatpush1.msra.mxu0 0.0
    %1014 = vmatprep.subr.mxu0 0.0
    %1015 = vmatpush1.msra.mxu0 0.0
    %1016 = vmatprep.subr.mxu0 0.0
    %1017 = vmatpush1.msra.mxu0 0.0
    %1018 = vmatprep.subr.mxu0 0.0
    %1019 = vmatpush1.msra.mxu0 0.0
    %1020 = vmatprep.subr.mxu0 0.0
    %1021 = vmatpush1.msra.mxu0 0.0
    %1022 = vmatprep.subr.mxu0 0.0
    %1023 = vmatpush1.msra.mxu0 0.0
    %1024 = vmatprep.subr.mxu0 0.0
    %1025 = vmatpush1.msra.mxu0 0.0
    %1026 = vmatprep.subr.mxu0 0.0
    %1027 = vmatpush1.msra.mxu0 0.0
    %1028 = vmatprep.subr.mxu0 0.0
    %v1029 = vand.u32 %v542, 4294901760
    %1030 = vmatpush1.msra.mxu0 %v1029
    %1031 = vmatprep.subr.mxu0 0.0
    %v1032 = vand.u32 %v541, 4294901760
    %1033 = vmatpush1.msra.mxu0 %v1032
    %1034 = vmatprep.subr.mxu0 0.0
    %v1035 = vand.u32 %v540, 4294901760
    %1036 = vmatpush1.msra.mxu0 %v1035
    %1037 = vmatprep.subr.mxu0 0.0
    %v1038 = vand.u32 %v539, 4294901760
    %1039 = vmatpush1.msra.mxu0 %v1038
    %1040 = vmatprep.subr.mxu0 0.0
    %v1041 = vand.u32 %v538, 4294901760
    %1042 = vmatpush1.msra.mxu0 %v1041
    %1043 = vmatprep.subr.mxu0 0.0
    %v1044 = vand.u32 %v537, 4294901760
    %1045 = vmatpush1.msra.mxu0 %v1044
    %1046 = vmatprep.subr.mxu0 0.0
    %v1047 = vand.u32 %v536, 4294901760
    %1048 = vmatpush1.msra.mxu0 %v1047
    %1049 = vmatprep.subr.mxu0 0.0
    %v1050 = vand.u32 %v535, 4294901760
    %1051 = vmatpush1.msra.mxu0 %v1050
    %1052 = vmatprep.subr.mxu0 0.0
    %1053 = vmatpush2.msra.mxu0 0.0
    %1054 = vmatprep.subr.mxu0 0.0
    %1055 = vmatpush2.msra.mxu0 0.0
    %1056 = vmatprep.subr.mxu0 0.0
    %1057 = vmatpush2.msra.mxu0 0.0
    %1058 = vmatprep.subr.mxu0 0.0
    %1059 = vmatpush2.msra.mxu0 0.0
    %1060 = vmatprep.subr.mxu0 0.0
    %1061 = vmatpush2.msra.mxu0 0.0
    %1062 = vmatprep.subr.mxu0 0.0
    %1063 = vmatpush2.msra.mxu0 0.0
    %1064 = vmatprep.subr.mxu0 0.0
    %1065 = vmatpush2.msra.mxu0 0.0
    %1066 = vmatprep.subr.mxu0 0.0
    %1067 = vmatpush2.msra.mxu0 0.0
    %1068 = vmatprep.subr.mxu0 0.0
    %1069 = vmatpush2.msra.mxu0 0.0
    %1070 = vmatprep.subr.mxu0 0.0
    %1071 = vmatpush2.msra.mxu0 0.0
    %1072 = vmatprep.subr.mxu0 0.0
    %1073 = vmatpush2.msra.mxu0 0.0
    %1074 = vmatprep.subr.mxu0 0.0
    %1075 = vmatpush2.msra.mxu0 0.0
    %1076 = vmatprep.subr.mxu0 0.0
    %1077 = vmatpush2.msra.mxu0 0.0
    %1078 = vmatprep.subr.mxu0 0.0
    %1079 = vmatpush2.msra.mxu0 0.0
    %1080 = vmatprep.subr.mxu0 0.0
    %1081 = vmatpush2.msra.mxu0 0.0
    %1082 = vmatprep.subr.mxu0 0.0
    %1083 = vmatpush2.msra.mxu0 0.0
    %1084 = vmatprep.mubr.f32.mxu0 0.0
    %v1085 = vand.u32 %v552, 4294901760
    %1086 = vmatmul.mubr.f32.gmra.mxu0 %v1085
    %v1087 = vpop.f32.mrf.mxu0
    %v1088 = vadd.f32 %v1009, %v1087
    %v1089 = vpop.f32.mrf.mxu0
    %1090 = vdwg.mxu0
    %v1091 = vmax.f32 %v1088, 0.0
    %v1092 = vld [vmem:[%s5] sm:$0xff]
    %v1093 = vld [vmem:[%s5 + $0x8] sm:$0xff]
    %v1094 = vld [vmem:[%s5 + $0x10] sm:$0xff]
    %v1095 = vld [vmem:[%s5 + $0x18] sm:$0xff]
    %v1096 = vld [vmem:[%s5 + $0x20] sm:$0xff]
    %v1097 = vld [vmem:[%s5 + $0x28] sm:$0xff]
    %v1098 = vld [vmem:[%s5 + $0x30] sm:$0xff]
    %v1099 = vld [vmem:[%s5 + $0x38] sm:$0xff]
    %v1100 = vld [vmem:[%s6] sm:$0x1]
    %v1102 = vlaneseq
    %v1103 = vshrl.u32 %v1102, 7
    %v1104 = vsub.s32 0, %v1103
    %v1105 = vrot.slane %v1100, %v1104
    %v1108 = vsel %vm550, %v1091, 0
    %1110 = vmatprep.subr.mxu0 0.0
    %1111 = vmatpush1.msra.mxu0 0.0
    %1112 = vmatprep.subr.mxu0 0.0
    %1113 = vmatpush1.msra.mxu0 0.0
    %1114 = vmatprep.subr.mxu0 0.0
    %1115 = vmatpush1.msra.mxu0 0.0
    %1116 = vmatprep.subr.mxu0 0.0
    %1117 = vmatpush1.msra.mxu0 0.0
    %1118 = vmatprep.subr.mxu0 0.0
    %1119 = vmatpush1.msra.mxu0 0.0
    %1120 = vmatprep.subr.mxu0 0.0
    %1121 = vmatpush1.msra.mxu0 0.0
    %1122 = vmatprep.subr.mxu0 0.0
    %1123 = vmatpush1.msra.mxu0 0.0
    %1124 = vmatprep.subr.mxu0 0.0
    %1125 = vmatpush1.msra.mxu0 0.0
    %1126 = vmatprep.subr.mxu0 0.0
    %v1127 = vand.u32 %v1099, 4294901760
    %1128 = vmatpush1.msra.mxu0 %v1127
    %1129 = vmatprep.subr.mxu0 0.0
    %v1130 = vand.u32 %v1098, 4294901760
    %1131 = vmatpush1.msra.mxu0 %v1130
    %1132 = vmatprep.subr.mxu0 0.0
    %v1133 = vand.u32 %v1097, 4294901760
    %1134 = vmatpush1.msra.mxu0 %v1133
    %1135 = vmatprep.subr.mxu0 0.0
    %v1136 = vand.u32 %v1096, 4294901760
    %1137 = vmatpush1.msra.mxu0 %v1136
    %1138 = vmatprep.subr.mxu0 0.0
    %v1139 = vand.u32 %v1095, 4294901760
    %1140 = vmatpush1.msra.mxu0 %v1139
    %1141 = vmatprep.subr.mxu0 0.0
    %v1142 = vand.u32 %v1094, 4294901760
    %1143 = vmatpush1.msra.mxu0 %v1142
    %1144 = vmatprep.subr.mxu0 0.0
    %v1145 = vand.u32 %v1093, 4294901760
    %1146 = vmatpush1.msra.mxu0 %v1145
    %1147 = vmatprep.subr.mxu0 0.0
    %v1148 = vand.u32 %v1092, 4294901760
    %1149 = vmatpush1.msra.mxu0 %v1148
    %1150 = vmatprep.subr.mxu0 0.0
    %1151 = vmatpush2.msra.mxu0 0.0
    %1152 = vmatprep.subr.mxu0 0.0
    %1153 = vmatpush2.msra.mxu0 0.0
    %1154 = vmatprep.subr.mxu0 0.0
    %1155 = vmatpush2.msra.mxu0 0.0
    %1156 = vmatprep.subr.mxu0 0.0
    %1157 = vmatpush2.msra.mxu0 0.0
    %1158 = vmatprep.subr.mxu0 0.0
    %1159 = vmatpush2.msra.mxu0 0.0
    %1160 = vmatprep.subr.mxu0 0.0
    %1161 = vmatpush2.msra.mxu0 0.0
    %1162 = vmatprep.subr.mxu0 0.0
    %1163 = vmatpush2.msra.mxu0 0.0
    %1164 = vmatprep.subr.mxu0 0.0
    %1165 = vmatpush2.msra.mxu0 0.0
    %1166 = vmatprep.subr.mxu0 0.0
    %1167 = vmatpush2.msra.mxu0 0.0
    %1168 = vmatprep.subr.mxu0 0.0
    %1169 = vmatpush2.msra.mxu0 0.0
    %1170 = vmatprep.subr.mxu0 0.0
    %1171 = vmatpush2.msra.mxu0 0.0
    %1172 = vmatprep.subr.mxu0 0.0
    %1173 = vmatpush2.msra.mxu0 0.0
    %1174 = vmatprep.subr.mxu0 0.0
    %1175 = vmatpush2.msra.mxu0 0.0
    %1176 = vmatprep.subr.mxu0 0.0
    %1177 = vmatpush2.msra.mxu0 0.0
    %1178 = vmatprep.subr.mxu0 0.0
    %1179 = vmatpush2.msra.mxu0 0.0
    %1180 = vmatprep.subr.mxu0 0.0
    %1181 = vmatpush2.msra.mxu0 0.0
    %1182 = vmatprep.mubr.f32.mxu0 0.0
    %v1183 = vand.u32 %v1108, 4294901760
    %v1184 = vsub.f32 %v1108, %v1183
    %v1185 = vand.u32 %v1184, 4294901760
    %v1186 = vsub.f32 %v1184, %v1185
    %v1187 = vand.u32 %v1186, 4294901760
    %1188 = vmatmul.mubr.f32.gmra.mxu0 %v1187
    %v1189 = vpop.f32.mrf.mxu0
    %v1190 = vadd.f32 %v1105, %v1189
    %v1191 = vpop.f32.mrf.mxu0
    %1192 = vdwg.mxu0
    %1193 = vmatprep.subr.mxu0 0.0
    %1194 = vmatpush1.msra.mxu0 0.0
    %1195 = vmatprep.subr.mxu0 0.0
    %1196 = vmatpush1.msra.mxu0 0.0
    %1197 = vmatprep.subr.mxu0 0.0
    %1198 = vmatpush1.msra.mxu0 0.0
    %1199 = vmatprep.subr.mxu0 0.0
    %1200 = vmatpush1.msra.mxu0 0.0
    %1201 = vmatprep.subr.mxu0 0.0
    %1202 = vmatpush1.msra.mxu0 0.0
    %1203 = vmatprep.subr.mxu0 0.0
    %1204 = vmatpush1.msra.mxu0 0.0
    %1205 = vmatprep.subr.mxu0 0.0
    %1206 = vmatpush1.msra.mxu0 0.0
    %1207 = vmatprep.subr.mxu0 0.0
    %1208 = vmatpush1.msra.mxu0 0.0
    %1209 = vmatprep.subr.mxu0 0.0
    %v1210 = vand.u32 %v1099, 4294901760
    %v1211 = vsub.f32 %v1099, %v1210
    %v1212 = vand.u32 %v1211, 4294901760
    %v1213 = vsub.f32 %v1211, %v1212
    %v1214 = vand.u32 %v1213, 4294901760
    %1215 = vmatpush1.msra.mxu0 %v1214
    %1216 = vmatprep.subr.mxu0 0.0
    %v1217 = vand.u32 %v1098, 4294901760
    %v1218 = vsub.f32 %v1098, %v1217
    %v1219 = vand.u32 %v1218, 4294901760
    %v1220 = vsub.f32 %v1218, %v1219
    %v1221 = vand.u32 %v1220, 4294901760
    %1222 = vmatpush1.msra.mxu0 %v1221
    %1223 = vmatprep.subr.mxu0 0.0
    %v1224 = vand.u32 %v1097, 4294901760
    %v1225 = vsub.f32 %v1097, %v1224
    %v1226 = vand.u32 %v1225, 4294901760
    %v1227 = vsub.f32 %v1225, %v1226
    %v1228 = vand.u32 %v1227, 4294901760
    %1229 = vmatpush1.msra.mxu0 %v1228
    %1230 = vmatprep.subr.mxu0 0.0
    %v1231 = vand.u32 %v1096, 4294901760
    %v1232 = vsub.f32 %v1096, %v1231
    %v1233 = vand.u32 %v1232, 4294901760
    %v1234 = vsub.f32 %v1232, %v1233
    %v1235 = vand.u32 %v1234, 4294901760
    %1236 = vmatpush1.msra.mxu0 %v1235
    %1237 = vmatprep.subr.mxu0 0.0
    %v1238 = vand.u32 %v1095, 4294901760
    %v1239 = vsub.f32 %v1095, %v1238
    %v1240 = vand.u32 %v1239, 4294901760
    %v1241 = vsub.f32 %v1239, %v1240
    %v1242 = vand.u32 %v1241, 4294901760
    %1243 = vmatpush1.msra.mxu0 %v1242
    %1244 = vmatprep.subr.mxu0 0.0
    %v1245 = vand.u32 %v1094, 4294901760
    %v1246 = vsub.f32 %v1094, %v1245
    %v1247 = vand.u32 %v1246, 4294901760
    %v1248 = vsub.f32 %v1246, %v1247
    %v1249 = vand.u32 %v1248, 4294901760
    %1250 = vmatpush1.msra.mxu0 %v1249
    %1251 = vmatprep.subr.mxu0 0.0
    %v1252 = vand.u32 %v1093, 4294901760
    %v1253 = vsub.f32 %v1093, %v1252
    %v1254 = vand.u32 %v1253, 4294901760
    %v1255 = vsub.f32 %v1253, %v1254
    %v1256 = vand.u32 %v1255, 4294901760
    %1257 = vmatpush1.msra.mxu0 %v1256
    %1258 = vmatprep.subr.mxu0 0.0
    %v1259 = vand.u32 %v1092, 4294901760
    %v1260 = vsub.f32 %v1092, %v1259
    %v1261 = vand.u32 %v1260, 4294901760
    %v1262 = vsub.f32 %v1260, %v1261
    %v1263 = vand.u32 %v1262, 4294901760
    %1264 = vmatpush1.msra.mxu0 %v1263
    %1265 = vmatprep.subr.mxu0 0.0
    %1266 = vmatpush2.msra.mxu0 0.0
    %1267 = vmatprep.subr.mxu0 0.0
    %1268 = vmatpush2.msra.mxu0 0.0
    %1269 = vmatprep.subr.mxu0 0.0
    %1270 = vmatpush2.msra.mxu0 0.0
    %1271 = vmatprep.subr.mxu0 0.0
    %1272 = vmatpush2.msra.mxu0 0.0
    %1273 = vmatprep.subr.mxu0 0.0
    %1274 = vmatpush2.msra.mxu0 0.0
    %1275 = vmatprep.subr.mxu0 0.0
    %1276 = vmatpush2.msra.mxu0 0.0
    %1277 = vmatprep.subr.mxu0 0.0
    %1278 = vmatpush2.msra.mxu0 0.0
    %1279 = vmatprep.subr.mxu0 0.0
    %1280 = vmatpush2.msra.mxu0 0.0
    %1281 = vmatprep.subr.mxu0 0.0
    %1282 = vmatpush2.msra.mxu0 0.0
    %1283 = vmatprep.subr.mxu0 0.0
    %1284 = vmatpush2.msra.mxu0 0.0
    %1285 = vmatprep.subr.mxu0 0.0
    %1286 = vmatpush2.msra.mxu0 0.0
    %1287 = vmatprep.subr.mxu0 0.0
    %1288 = vmatpush2.msra.mxu0 0.0
    %1289 = vmatprep.subr.mxu0 0.0
    %1290 = vmatpush2.msra.mxu0 0.0
    %1291 = vmatprep.subr.mxu0 0.0
    %1292 = vmatpush2.msra.mxu0 0.0
    %1293 = vmatprep.subr.mxu0 0.0
    %1294 = vmatpush2.msra.mxu0 0.0
    %1295 = vmatprep.subr.mxu0 0.0
    %1296 = vmatpush2.msra.mxu0 0.0
    %1297 = vmatprep.mubr.f32.mxu0 0.0
    %v1298 = vand.u32 %v1108, 4294901760
    %1299 = vmatmul.mubr.f32.gmra.mxu0 %v1298
    %v1300 = vpop.f32.mrf.mxu0
    %v1301 = vadd.f32 %v1190, %v1300
    %v1302 = vpop.f32.mrf.mxu0
    %1303 = vdwg.mxu0
    %1304 = vmatprep.subr.mxu0 0.0
    %1305 = vmatpush1.msra.mxu0 0.0
    %1306 = vmatprep.subr.mxu0 0.0
    %1307 = vmatpush1.msra.mxu0 0.0
    %1308 = vmatprep.subr.mxu0 0.0
    %1309 = vmatpush1.msra.mxu0 0.0
    %1310 = vmatprep.subr.mxu0 0.0
    %1311 = vmatpush1.msra.mxu0 0.0
    %1312 = vmatprep.subr.mxu0 0.0
    %1313 = vmatpush1.msra.mxu0 0.0
    %1314 = vmatprep.subr.mxu0 0.0
    %1315 = vmatpush1.msra.mxu0 0.0
    %1316 = vmatprep.subr.mxu0 0.0
    %1317 = vmatpush1.msra.mxu0 0.0
    %1318 = vmatprep.subr.mxu0 0.0
    %1319 = vmatpush1.msra.mxu0 0.0
    %1320 = vmatprep.subr.mxu0 0.0
    %v1321 = vand.u32 %v1099, 4294901760
    %v1322 = vsub.f32 %v1099, %v1321
    %1323 = vmatpush1.msra.mxu0 %v1322
    %1324 = vmatprep.subr.mxu0 0.0
    %v1325 = vand.u32 %v1098, 4294901760
    %v1326 = vsub.f32 %v1098, %v1325
    %1327 = vmatpush1.msra.mxu0 %v1326
    %1328 = vmatprep.subr.mxu0 0.0
    %v1329 = vand.u32 %v1097, 4294901760
    %v1330 = vsub.f32 %v1097, %v1329
    %1331 = vmatpush1.msra.mxu0 %v1330
    %1332 = vmatprep.subr.mxu0 0.0
    %v1333 = vand.u32 %v1096, 4294901760
    %v1334 = vsub.f32 %v1096, %v1333
    %1335 = vmatpush1.msra.mxu0 %v1334
    %1336 = vmatprep.subr.mxu0 0.0
    %v1337 = vand.u32 %v1095, 4294901760
    %v1338 = vsub.f32 %v1095, %v1337
    %1339 = vmatpush1.msra.mxu0 %v1338
    %1340 = vmatprep.subr.mxu0 0.0
    %v1341 = vand.u32 %v1094, 4294901760
    %v1342 = vsub.f32 %v1094, %v1341
    %1343 = vmatpush1.msra.mxu0 %v1342
    %1344 = vmatprep.subr.mxu0 0.0
    %v1345 = vand.u32 %v1093, 4294901760
    %v1346 = vsub.f32 %v1093, %v1345
    %1347 = vmatpush1.msra.mxu0 %v1346
    %1348 = vmatprep.subr.mxu0 0.0
    %v1349 = vand.u32 %v1092, 4294901760
    %v1350 = vsub.f32 %v1092, %v1349
    %1351 = vmatpush1.msra.mxu0 %v1350
    %1352 = vmatprep.subr.mxu0 0.0
    %1353 = vmatpush2.msra.mxu0 0.0
    %1354 = vmatprep.subr.mxu0 0.0
    %1355 = vmatpush2.msra.mxu0 0.0
    %1356 = vmatprep.subr.mxu0 0.0
    %1357 = vmatpush2.msra.mxu0 0.0
    %1358 = vmatprep.subr.mxu0 0.0
    %1359 = vmatpush2.msra.mxu0 0.0
    %1360 = vmatprep.subr.mxu0 0.0
    %1361 = vmatpush2.msra.mxu0 0.0
    %1362 = vmatprep.subr.mxu0 0.0
    %1363 = vmatpush2.msra.mxu0 0.0
    %1364 = vmatprep.subr.mxu0 0.0
    %1365 = vmatpush2.msra.mxu0 0.0
    %1366 = vmatprep.subr.mxu0 0.0
    %1367 = vmatpush2.msra.mxu0 0.0
    %1368 = vmatprep.subr.mxu0 0.0
    %1369 = vmatpush2.msra.mxu0 0.0
    %1370 = vmatprep.subr.mxu0 0.0
    %1371 = vmatpush2.msra.mxu0 0.0
    %1372 = vmatprep.subr.mxu0 0.0
    %1373 = vmatpush2.msra.mxu0 0.0
    %1374 = vmatprep.subr.mxu0 0.0
    %1375 = vmatpush2.msra.mxu0 0.0
    %1376 = vmatprep.subr.mxu0 0.0
    %1377 = vmatpush2.msra.mxu0 0.0
    %1378 = vmatprep.subr.mxu0 0.0
    %1379 = vmatpush2.msra.mxu0 0.0
    %1380 = vmatprep.subr.mxu0 0.0
    %1381 = vmatpush2.msra.mxu0 0.0
    %1382 = vmatprep.subr.mxu0 0.0
    %1383 = vmatpush2.msra.mxu0 0.0
    %1384 = vmatprep.mubr.f32.mxu0 0.0
    %v1385 = vand.u32 %v1108, 4294901760
    %v1386 = vsub.f32 %v1108, %v1385
    %1387 = vmatmul.mubr.f32.gmra.mxu0 %v1386
    %v1388 = vpop.f32.mrf.mxu0
    %v1389 = vadd.f32 %v1301, %v1388
    %v1390 = vpop.f32.mrf.mxu0
    %1391 = vdwg.mxu0
    %1392 = vmatprep.subr.mxu0 0.0
    %1393 = vmatpush1.msra.mxu0 0.0
    %1394 = vmatprep.subr.mxu0 0.0
    %1395 = vmatpush1.msra.mxu0 0.0
    %1396 = vmatprep.subr.mxu0 0.0
    %1397 = vmatpush1.msra.mxu0 0.0
    %1398 = vmatprep.subr.mxu0 0.0
    %1399 = vmatpush1.msra.mxu0 0.0
    %1400 = vmatprep.subr.mxu0 0.0
    %1401 = vmatpush1.msra.mxu0 0.0
    %1402 = vmatprep.subr.mxu0 0.0
    %1403 = vmatpush1.msra.mxu0 0.0
    %1404 = vmatprep.subr.mxu0 0.0
    %1405 = vmatpush1.msra.mxu0 0.0
    %1406 = vmatprep.subr.mxu0 0.0
    %1407 = vmatpush1.msra.mxu0 0.0
    %1408 = vmatprep.subr.mxu0 0.0
    %v1409 = vand.u32 %v1099, 4294901760
    %1410 = vmatpush1.msra.mxu0 %v1409
    %1411 = vmatprep.subr.mxu0 0.0
    %v1412 = vand.u32 %v1098, 4294901760
    %1413 = vmatpush1.msra.mxu0 %v1412
    %1414 = vmatprep.subr.mxu0 0.0
    %v1415 = vand.u32 %v1097, 4294901760
    %1416 = vmatpush1.msra.mxu0 %v1415
    %1417 = vmatprep.subr.mxu0 0.0
    %v1418 = vand.u32 %v1096, 4294901760
    %1419 = vmatpush1.msra.mxu0 %v1418
    %1420 = vmatprep.subr.mxu0 0.0
    %v1421 = vand.u32 %v1095, 4294901760
    %1422 = vmatpush1.msra.mxu0 %v1421
    %1423 = vmatprep.subr.mxu0 0.0
    %v1424 = vand.u32 %v1094, 4294901760
    %1425 = vmatpush1.msra.mxu0 %v1424
    %1426 = vmatprep.subr.mxu0 0.0
    %v1427 = vand.u32 %v1093, 4294901760
    %1428 = vmatpush1.msra.mxu0 %v1427
    %1429 = vmatprep.subr.mxu0 0.0
    %v1430 = vand.u32 %v1092, 4294901760
    %1431 = vmatpush1.msra.mxu0 %v1430
    %1432 = vmatprep.subr.mxu0 0.0
    %1433 = vmatpush2.msra.mxu0 0.0
    %1434 = vmatprep.subr.mxu0 0.0
    %1435 = vmatpush2.msra.mxu0 0.0
    %1436 = vmatprep.subr.mxu0 0.0
    %1437 = vmatpush2.msra.mxu0 0.0
    %1438 = vmatprep.subr.mxu0 0.0
    %1439 = vmatpush2.msra.mxu0 0.0
    %1440 = vmatprep.subr.mxu0 0.0
    %1441 = vmatpush2.msra.mxu0 0.0
    %1442 = vmatprep.subr.mxu0 0.0
    %1443 = vmatpush2.msra.mxu0 0.0
    %1444 = vmatprep.subr.mxu0 0.0
    %1445 = vmatpush2.msra.mxu0 0.0
    %1446 = vmatprep.subr.mxu0 0.0
    %1447 = vmatpush2.msra.mxu0 0.0
    %1448 = vmatprep.subr.mxu0 0.0
    %1449 = vmatpush2.msra.mxu0 0.0
    %1450 = vmatprep.subr.mxu0 0.0
    %1451 = vmatpush2.msra.mxu0 0.0
    %1452 = vmatprep.subr.mxu0 0.0
    %1453 = vmatpush2.msra.mxu0 0.0
    %1454 = vmatprep.subr.mxu0 0.0
    %1455 = vmatpush2.msra.mxu0 0.0
    %1456 = vmatprep.subr.mxu0 0.0
    %1457 = vmatpush2.msra.mxu0 0.0
    %1458 = vmatprep.subr.mxu0 0.0
    %1459 = vmatpush2.msra.mxu0 0.0
    %1460 = vmatprep.subr.mxu0 0.0
    %1461 = vmatpush2.msra.mxu0 0.0
    %1462 = vmatprep.subr.mxu0 0.0
    %1463 = vmatpush2.msra.mxu0 0.0
    %1464 = vmatprep.mubr.f32.mxu0 0.0
    %v1465 = vand.u32 %v1108, 4294901760
    %v1466 = vsub.f32 %v1108, %v1465
    %v1467 = vand.u32 %v1466, 4294901760
    %1468 = vmatmul.mubr.f32.gmra.mxu0 %v1467
    %v1469 = vpop.f32.mrf.mxu0
    %v1470 = vadd.f32 %v1389, %v1469
    %v1471 = vpop.f32.mrf.mxu0
    %1472 = vdwg.mxu0
    %1473 = vmatprep.subr.mxu0 0.0
    %1474 = vmatpush1.msra.mxu0 0.0
    %1475 = vmatprep.subr.mxu0 0.0
    %1476 = vmatpush1.msra.mxu0 0.0
    %1477 = vmatprep.subr.mxu0 0.0
    %1478 = vmatpush1.msra.mxu0 0.0
    %1479 = vmatprep.subr.mxu0 0.0
    %1480 = vmatpush1.msra.mxu0 0.0
    %1481 = vmatprep.subr.mxu0 0.0
    %1482 = vmatpush1.msra.mxu0 0.0
    %1483 = vmatprep.subr.mxu0 0.0
    %1484 = vmatpush1.msra.mxu0 0.0
    %1485 = vmatprep.subr.mxu0 0.0
    %1486 = vmatpush1.msra.mxu0 0.0
    %1487 = vmatprep.subr.mxu0 0.0
    %1488 = vmatpush1.msra.mxu0 0.0
    %1489 = vmatprep.subr.mxu0 0.0
    %v1490 = vand.u32 %v1099, 4294901760
    %v1491 = vsub.f32 %v1099, %v1490
    %v1492 = vand.u32 %v1491, 4294901760
    %1493 = vmatpush1.msra.mxu0 %v1492
    %1494 = vmatprep.subr.mxu0 0.0
    %v1495 = vand.u32 %v1098, 4294901760
    %v1496 = vsub.f32 %v1098, %v1495
    %v1497 = vand.u32 %v1496, 4294901760
    %1498 = vmatpush1.msra.mxu0 %v1497
    %1499 = vmatprep.subr.mxu0 0.0
    %v1500 = vand.u32 %v1097, 4294901760
    %v1501 = vsub.f32 %v1097, %v1500
    %v1502 = vand.u32 %v1501, 4294901760
    %1503 = vmatpush1.msra.mxu0 %v1502
    %1504 = vmatprep.subr.mxu0 0.0
    %v1505 = vand.u32 %v1096, 4294901760
    %v1506 = vsub.f32 %v1096, %v1505
    %v1507 = vand.u32 %v1506, 4294901760
    %1508 = vmatpush1.msra.mxu0 %v1507
    %1509 = vmatprep.subr.mxu0 0.0
    %v1510 = vand.u32 %v1095, 4294901760
    %v1511 = vsub.f32 %v1095, %v1510
    %v1512 = vand.u32 %v1511, 4294901760
    %1513 = vmatpush1.msra.mxu0 %v1512
    %1514 = vmatprep.subr.mxu0 0.0
    %v1515 = vand.u32 %v1094, 4294901760
    %v1516 = vsub.f32 %v1094, %v1515
    %v1517 = vand.u32 %v1516, 4294901760
    %1518 = vmatpush1.msra.mxu0 %v1517
    %1519 = vmatprep.subr.mxu0 0.0
    %v1520 = vand.u32 %v1093, 4294901760
    %v1521 = vsub.f32 %v1093, %v1520
    %v1522 = vand.u32 %v1521, 4294901760
    %1523 = vmatpush1.msra.mxu0 %v1522
    %1524 = vmatprep.subr.mxu0 0.0
    %v1525 = vand.u32 %v1092, 4294901760
    %v1526 = vsub.f32 %v1092, %v1525
    %v1527 = vand.u32 %v1526, 4294901760
    %1528 = vmatpush1.msra.mxu0 %v1527
    %1529 = vmatprep.subr.mxu0 0.0
    %1530 = vmatpush2.msra.mxu0 0.0
    %1531 = vmatprep.subr.mxu0 0.0
    %1532 = vmatpush2.msra.mxu0 0.0
    %1533 = vmatprep.subr.mxu0 0.0
    %1534 = vmatpush2.msra.mxu0 0.0
    %1535 = vmatprep.subr.mxu0 0.0
    %1536 = vmatpush2.msra.mxu0 0.0
    %1537 = vmatprep.subr.mxu0 0.0
    %1538 = vmatpush2.msra.mxu0 0.0
    %1539 = vmatprep.subr.mxu0 0.0
    %1540 = vmatpush2.msra.mxu0 0.0
    %1541 = vmatprep.subr.mxu0 0.0
    %1542 = vmatpush2.msra.mxu0 0.0
    %1543 = vmatprep.subr.mxu0 0.0
    %1544 = vmatpush2.msra.mxu0 0.0
    %1545 = vmatprep.subr.mxu0 0.0
    %1546 = vmatpush2.msra.mxu0 0.0
    %1547 = vmatprep.subr.mxu0 0.0
    %1548 = vmatpush2.msra.mxu0 0.0
    %1549 = vmatprep.subr.mxu0 0.0
    %1550 = vmatpush2.msra.mxu0 0.0
    %1551 = vmatprep.subr.mxu0 0.0
    %1552 = vmatpush2.msra.mxu0 0.0
    %1553 = vmatprep.subr.mxu0 0.0
    %1554 = vmatpush2.msra.mxu0 0.0
    %1555 = vmatprep.subr.mxu0 0.0
    %1556 = vmatpush2.msra.mxu0 0.0
    %1557 = vmatprep.subr.mxu0 0.0
    %1558 = vmatpush2.msra.mxu0 0.0
    %1559 = vmatprep.subr.mxu0 0.0
    %1560 = vmatpush2.msra.mxu0 0.0
    %1561 = vmatprep.mubr.f32.mxu0 0.0
    %v1562 = vand.u32 %v1108, 4294901760
    %1563 = vmatmul.mubr.f32.gmra.mxu0 %v1562
    %v1564 = vpop.f32.mrf.mxu0
    %v1565 = vadd.f32 %v1470, %v1564
    %v1566 = vpop.f32.mrf.mxu0
    %1567 = vdwg.mxu0
    %1568 = vmatprep.subr.mxu0 0.0
    %1569 = vmatpush1.msra.mxu0 0.0
    %1570 = vmatprep.subr.mxu0 0.0
    %1571 = vmatpush1.msra.mxu0 0.0
    %1572 = vmatprep.subr.mxu0 0.0
    %1573 = vmatpush1.msra.mxu0 0.0
    %1574 = vmatprep.subr.mxu0 0.0
    %1575 = vmatpush1.msra.mxu0 0.0
    %1576 = vmatprep.subr.mxu0 0.0
    %1577 = vmatpush1.msra.mxu0 0.0
    %1578 = vmatprep.subr.mxu0 0.0
    %1579 = vmatpush1.msra.mxu0 0.0
    %1580 = vmatprep.subr.mxu0 0.0
    %1581 = vmatpush1.msra.mxu0 0.0
    %1582 = vmatprep.subr.mxu0 0.0
    %1583 = vmatpush1.msra.mxu0 0.0
    %1584 = vmatprep.subr.mxu0 0.0
    %v1585 = vand.u32 %v1099, 4294901760
    %1586 = vmatpush1.msra.mxu0 %v1585
    %1587 = vmatprep.subr.mxu0 0.0
    %v1588 = vand.u32 %v1098, 4294901760
    %1589 = vmatpush1.msra.mxu0 %v1588
    %1590 = vmatprep.subr.mxu0 0.0
    %v1591 = vand.u32 %v1097, 4294901760
    %1592 = vmatpush1.msra.mxu0 %v1591
    %1593 = vmatprep.subr.mxu0 0.0
    %v1594 = vand.u32 %v1096, 4294901760
    %1595 = vmatpush1.msra.mxu0 %v1594
    %1596 = vmatprep.subr.mxu0 0.0
    %v1597 = vand.u32 %v1095, 4294901760
    %1598 = vmatpush1.msra.mxu0 %v1597
    %1599 = vmatprep.subr.mxu0 0.0
    %v1600 = vand.u32 %v1094, 4294901760
    %1601 = vmatpush1.msra.mxu0 %v1600
    %1602 = vmatprep.subr.mxu0 0.0
    %v1603 = vand.u32 %v1093, 4294901760
    %1604 = vmatpush1.msra.mxu0 %v1603
    %1605 = vmatprep.subr.mxu0 0.0
    %v1606 = vand.u32 %v1092, 4294901760
    %1607 = vmatpush1.msra.mxu0 %v1606
    %1608 = vmatprep.subr.mxu0 0.0
    %1609 = vmatpush2.msra.mxu0 0.0
    %1610 = vmatprep.subr.mxu0 0.0
    %1611 = vmatpush2.msra.mxu0 0.0
    %1612 = vmatprep.subr.mxu0 0.0
    %1613 = vmatpush2.msra.mxu0 0.0
    %1614 = vmatprep.subr.mxu0 0.0
    %1615 = vmatpush2.msra.mxu0 0.0
    %1616 = vmatprep.subr.mxu0 0.0
    %1617 = vmatpush2.msra.mxu0 0.0
    %1618 = vmatprep.subr.mxu0 0.0
    %1619 = vmatpush2.msra.mxu0 0.0
    %1620 = vmatprep.subr.mxu0 0.0
    %1621 = vmatpush2.msra.mxu0 0.0
    %1622 = vmatprep.subr.mxu0 0.0
    %1623 = vmatpush2.msra.mxu0 0.0
    %1624 = vmatprep.subr.mxu0 0.0
    %1625 = vmatpush2.msra.mxu0 0.0
    %1626 = vmatprep.subr.mxu0 0.0
    %1627 = vmatpush2.msra.mxu0 0.0
    %1628 = vmatprep.subr.mxu0 0.0
    %1629 = vmatpush2.msra.mxu0 0.0
    %1630 = vmatprep.subr.mxu0 0.0
    %1631 = vmatpush2.msra.mxu0 0.0
    %1632 = vmatprep.subr.mxu0 0.0
    %1633 = vmatpush2.msra.mxu0 0.0
    %1634 = vmatprep.subr.mxu0 0.0
    %1635 = vmatpush2.msra.mxu0 0.0
    %1636 = vmatprep.subr.mxu0 0.0
    %1637 = vmatpush2.msra.mxu0 0.0
    %1638 = vmatprep.subr.mxu0 0.0
    %1639 = vmatpush2.msra.mxu0 0.0
    %1640 = vmatprep.mubr.f32.mxu0 0.0
    %v1641 = vand.u32 %v1108, 4294901760
    %1642 = vmatmul.mubr.f32.gmra.mxu0 %v1641
    %v1643 = vpop.f32.mrf.mxu0
    %v1644 = vadd.f32 %v1565, %v1643
    %v1645 = vpop.f32.mrf.mxu0
    %1646 = vdwg.mxu0
    %v1647 = vmax.f32 %v1644, 0.0
    %v1648 = vld [vmem:[%s7] sm:$0xff]
    %v1649 = vld [vmem:[%s7 + $0x8] sm:$0xff]
    %v1650 = vld [vmem:[%s7 + $0x10] sm:$0xff]
    %v1651 = vld [vmem:[%s7 + $0x18] sm:$0xff]
    %v1652 = vld [vmem:[%s8] sm:$0x1]
    %v1654 = vlaneseq
    %v1655 = vshrl.u32 %v1654, 7
    %v1656 = vsub.s32 0, %v1655
    %v1657 = vrot.slane %v1652, %v1656
    %v1660 = vsel %vm45, %v1647, 0
    %1662 = vmatprep.subr.mxu0 0.0
    %1663 = vmatpush1.msra.mxu0 0.0
    %1664 = vmatprep.subr.mxu0 0.0
    %1665 = vmatpush1.msra.mxu0 0.0
    %1666 = vmatprep.subr.mxu0 0.0
    %1667 = vmatpush1.msra.mxu0 0.0
    %1668 = vmatprep.subr.mxu0 0.0
    %1669 = vmatpush1.msra.mxu0 0.0
    %1670 = vmatprep.subr.mxu0 0.0
    %1671 = vmatpush1.msra.mxu0 0.0
    %1672 = vmatprep.subr.mxu0 0.0
    %1673 = vmatpush1.msra.mxu0 0.0
    %1674 = vmatprep.subr.mxu0 0.0
    %1675 = vmatpush1.msra.mxu0 0.0
    %1676 = vmatprep.subr.mxu0 0.0
    %1677 = vmatpush1.msra.mxu0 0.0
    %1678 = vmatprep.subr.mxu0 0.0
    %1679 = vmatpush1.msra.mxu0 0.0
    %1680 = vmatprep.subr.mxu0 0.0
    %1681 = vmatpush1.msra.mxu0 0.0
    %1682 = vmatprep.subr.mxu0 0.0
    %1683 = vmatpush1.msra.mxu0 0.0
    %1684 = vmatprep.subr.mxu0 0.0
    %1685 = vmatpush1.msra.mxu0 0.0
    %1686 = vmatprep.subr.mxu0 0.0
    %v1687 = vand.u32 %v1651, 4294901760
    %1688 = vmatpush1.msra.mxu0 %v1687
    %1689 = vmatprep.subr.mxu0 0.0
    %v1690 = vand.u32 %v1650, 4294901760
    %1691 = vmatpush1.msra.mxu0 %v1690
    %1692 = vmatprep.subr.mxu0 0.0
    %v1693 = vand.u32 %v1649, 4294901760
    %1694 = vmatpush1.msra.mxu0 %v1693
    %1695 = vmatprep.subr.mxu0 0.0
    %v1696 = vand.u32 %v1648, 4294901760
    %1697 = vmatpush1.msra.mxu0 %v1696
    %1698 = vmatprep.subr.mxu0 0.0
    %1699 = vmatpush2.msra.mxu0 0.0
    %1700 = vmatprep.subr.mxu0 0.0
    %1701 = vmatpush2.msra.mxu0 0.0
    %1702 = vmatprep.subr.mxu0 0.0
    %1703 = vmatpush2.msra.mxu0 0.0
    %1704 = vmatprep.subr.mxu0 0.0
    %1705 = vmatpush2.msra.mxu0 0.0
    %1706 = vmatprep.subr.mxu0 0.0
    %1707 = vmatpush2.msra.mxu0 0.0
    %1708 = vmatprep.subr.mxu0 0.0
    %1709 = vmatpush2.msra.mxu0 0.0
    %1710 = vmatprep.subr.mxu0 0.0
    %1711 = vmatpush2.msra.mxu0 0.0
    %1712 = vmatprep.subr.mxu0 0.0
    %1713 = vmatpush2.msra.mxu0 0.0
    %1714 = vmatprep.subr.mxu0 0.0
    %1715 = vmatpush2.msra.mxu0 0.0
    %1716 = vmatprep.subr.mxu0 0.0
    %1717 = vmatpush2.msra.mxu0 0.0
    %1718 = vmatprep.subr.mxu0 0.0
    %1719 = vmatpush2.msra.mxu0 0.0
    %1720 = vmatprep.subr.mxu0 0.0
    %1721 = vmatpush2.msra.mxu0 0.0
    %1722 = vmatprep.subr.mxu0 0.0
    %1723 = vmatpush2.msra.mxu0 0.0
    %1724 = vmatprep.subr.mxu0 0.0
    %1725 = vmatpush2.msra.mxu0 0.0
    %1726 = vmatprep.subr.mxu0 0.0
    %1727 = vmatpush2.msra.mxu0 0.0
    %1728 = vmatprep.subr.mxu0 0.0
    %1729 = vmatpush2.msra.mxu0 0.0
    %1730 = vmatprep.mubr.f32.mxu0 0.0
    %v1731 = vand.u32 %v1660, 4294901760
    %v1732 = vsub.f32 %v1660, %v1731
    %v1733 = vand.u32 %v1732, 4294901760
    %v1734 = vsub.f32 %v1732, %v1733
    %v1735 = vand.u32 %v1734, 4294901760
    %1736 = vmatmul.mubr.f32.gmra.mxu0 %v1735
    %v1737 = vpop.f32.mrf.mxu0
    %v1738 = vadd.f32 %v1657, %v1737
    %v1739 = vpop.f32.mrf.mxu0
    %1740 = vdwg.mxu0
    %1741 = vmatprep.subr.mxu0 0.0
    %1742 = vmatpush1.msra.mxu0 0.0
    %1743 = vmatprep.subr.mxu0 0.0
    %1744 = vmatpush1.msra.mxu0 0.0
    %1745 = vmatprep.subr.mxu0 0.0
    %1746 = vmatpush1.msra.mxu0 0.0
    %1747 = vmatprep.subr.mxu0 0.0
    %1748 = vmatpush1.msra.mxu0 0.0
    %1749 = vmatprep.subr.mxu0 0.0
    %1750 = vmatpush1.msra.mxu0 0.0
    %1751 = vmatprep.subr.mxu0 0.0
    %1752 = vmatpush1.msra.mxu0 0.0
    %1753 = vmatprep.subr.mxu0 0.0
    %1754 = vmatpush1.msra.mxu0 0.0
    %1755 = vmatprep.subr.mxu0 0.0
    %1756 = vmatpush1.msra.mxu0 0.0
    %1757 = vmatprep.subr.mxu0 0.0
    %1758 = vmatpush1.msra.mxu0 0.0
    %1759 = vmatprep.subr.mxu0 0.0
    %1760 = vmatpush1.msra.mxu0 0.0
    %1761 = vmatprep.subr.mxu0 0.0
    %1762 = vmatpush1.msra.mxu0 0.0
    %1763 = vmatprep.subr.mxu0 0.0
    %1764 = vmatpush1.msra.mxu0 0.0
    %1765 = vmatprep.subr.mxu0 0.0
    %v1766 = vand.u32 %v1651, 4294901760
    %v1767 = vsub.f32 %v1651, %v1766
    %v1768 = vand.u32 %v1767, 4294901760
    %v1769 = vsub.f32 %v1767, %v1768
    %v1770 = vand.u32 %v1769, 4294901760
    %1771 = vmatpush1.msra.mxu0 %v1770
    %1772 = vmatprep.subr.mxu0 0.0
    %v1773 = vand.u32 %v1650, 4294901760
    %v1774 = vsub.f32 %v1650, %v1773
    %v1775 = vand.u32 %v1774, 4294901760
    %v1776 = vsub.f32 %v1774, %v1775
    %v1777 = vand.u32 %v1776, 4294901760
    %1778 = vmatpush1.msra.mxu0 %v1777
    %1779 = vmatprep.subr.mxu0 0.0
    %v1780 = vand.u32 %v1649, 4294901760
    %v1781 = vsub.f32 %v1649, %v1780
    %v1782 = vand.u32 %v1781, 4294901760
    %v1783 = vsub.f32 %v1781, %v1782
    %v1784 = vand.u32 %v1783, 4294901760
    %1785 = vmatpush1.msra.mxu0 %v1784
    %1786 = vmatprep.subr.mxu0 0.0
    %v1787 = vand.u32 %v1648, 4294901760
    %v1788 = vsub.f32 %v1648, %v1787
    %v1789 = vand.u32 %v1788, 4294901760
    %v1790 = vsub.f32 %v1788, %v1789
    %v1791 = vand.u32 %v1790, 4294901760
    %1792 = vmatpush1.msra.mxu0 %v1791
    %1793 = vmatprep.subr.mxu0 0.0
    %1794 = vmatpush2.msra.mxu0 0.0
    %1795 = vmatprep.subr.mxu0 0.0
    %1796 = vmatpush2.msra.mxu0 0.0
    %1797 = vmatprep.subr.mxu0 0.0
    %1798 = vmatpush2.msra.mxu0 0.0
    %1799 = vmatprep.subr.mxu0 0.0
    %1800 = vmatpush2.msra.mxu0 0.0
    %1801 = vmatprep.subr.mxu0 0.0
    %1802 = vmatpush2.msra.mxu0 0.0
    %1803 = vmatprep.subr.mxu0 0.0
    %1804 = vmatpush2.msra.mxu0 0.0
    %1805 = vmatprep.subr.mxu0 0.0
    %1806 = vmatpush2.msra.mxu0 0.0
    %1807 = vmatprep.subr.mxu0 0.0
    %1808 = vmatpush2.msra.mxu0 0.0
    %1809 = vmatprep.subr.mxu0 0.0
    %1810 = vmatpush2.msra.mxu0 0.0
    %1811 = vmatprep.subr.mxu0 0.0
    %1812 = vmatpush2.msra.mxu0 0.0
    %1813 = vmatprep.subr.mxu0 0.0
    %1814 = vmatpush2.msra.mxu0 0.0
    %1815 = vmatprep.subr.mxu0 0.0
    %1816 = vmatpush2.msra.mxu0 0.0
    %1817 = vmatprep.subr.mxu0 0.0
    %1818 = vmatpush2.msra.mxu0 0.0
    %1819 = vmatprep.subr.mxu0 0.0
    %1820 = vmatpush2.msra.mxu0 0.0
    %1821 = vmatprep.subr.mxu0 0.0
    %1822 = vmatpush2.msra.mxu0 0.0
    %1823 = vmatprep.subr.mxu0 0.0
    %1824 = vmatpush2.msra.mxu0 0.0
    %1825 = vmatprep.mubr.f32.mxu0 0.0
    %v1826 = vand.u32 %v1660, 4294901760
    %1827 = vmatmul.mubr.f32.gmra.mxu0 %v1826
    %v1828 = vpop.f32.mrf.mxu0
    %v1829 = vadd.f32 %v1738, %v1828
    %v1830 = vpop.f32.mrf.mxu0
    %1831 = vdwg.mxu0
    %1832 = vmatprep.subr.mxu0 0.0
    %1833 = vmatpush1.msra.mxu0 0.0
    %1834 = vmatprep.subr.mxu0 0.0
    %1835 = vmatpush1.msra.mxu0 0.0
    %1836 = vmatprep.subr.mxu0 0.0
    %1837 = vmatpush1.msra.mxu0 0.0
    %1838 = vmatprep.subr.mxu0 0.0
    %1839 = vmatpush1.msra.mxu0 0.0
    %1840 = vmatprep.subr.mxu0 0.0
    %1841 = vmatpush1.msra.mxu0 0.0
    %1842 = vmatprep.subr.mxu0 0.0
    %1843 = vmatpush1.msra.mxu0 0.0
    %1844 = vmatprep.subr.mxu0 0.0
    %1845 = vmatpush1.msra.mxu0 0.0
    %1846 = vmatprep.subr.mxu0 0.0
    %1847 = vmatpush1.msra.mxu0 0.0
    %1848 = vmatprep.subr.mxu0 0.0
    %1849 = vmatpush1.msra.mxu0 0.0
    %1850 = vmatprep.subr.mxu0 0.0
    %1851 = vmatpush1.msra.mxu0 0.0
    %1852 = vmatprep.subr.mxu0 0.0
    %1853 = vmatpush1.msra.mxu0 0.0
    %1854 = vmatprep.subr.mxu0 0.0
    %1855 = vmatpush1.msra.mxu0 0.0
    %1856 = vmatprep.subr.mxu0 0.0
    %v1857 = vand.u32 %v1651, 4294901760
    %v1858 = vsub.f32 %v1651, %v1857
    %1859 = vmatpush1.msra.mxu0 %v1858
    %1860 = vmatprep.subr.mxu0 0.0
    %v1861 = vand.u32 %v1650, 4294901760
    %v1862 = vsub.f32 %v1650, %v1861
    %1863 = vmatpush1.msra.mxu0 %v1862
    %1864 = vmatprep.subr.mxu0 0.0
    %v1865 = vand.u32 %v1649, 4294901760
    %v1866 = vsub.f32 %v1649, %v1865
    %1867 = vmatpush1.msra.mxu0 %v1866
    %1868 = vmatprep.subr.mxu0 0.0
    %v1869 = vand.u32 %v1648, 4294901760
    %v1870 = vsub.f32 %v1648, %v1869
    %1871 = vmatpush1.msra.mxu0 %v1870
    %1872 = vmatprep.subr.mxu0 0.0
    %1873 = vmatpush2.msra.mxu0 0.0
    %1874 = vmatprep.subr.mxu0 0.0
    %1875 = vmatpush2.msra.mxu0 0.0
    %1876 = vmatprep.subr.mxu0 0.0
    %1877 = vmatpush2.msra.mxu0 0.0
    %1878 = vmatprep.subr.mxu0 0.0
    %1879 = vmatpush2.msra.mxu0 0.0
    %1880 = vmatprep.subr.mxu0 0.0
    %1881 = vmatpush2.msra.mxu0 0.0
    %1882 = vmatprep.subr.mxu0 0.0
    %1883 = vmatpush2.msra.mxu0 0.0
    %1884 = vmatprep.subr.mxu0 0.0
    %1885 = vmatpush2.msra.mxu0 0.0
    %1886 = vmatprep.subr.mxu0 0.0
    %1887 = vmatpush2.msra.mxu0 0.0
    %1888 = vmatprep.subr.mxu0 0.0
    %1889 = vmatpush2.msra.mxu0 0.0
    %1890 = vmatprep.subr.mxu0 0.0
    %1891 = vmatpush2.msra.mxu0 0.0
    %1892 = vmatprep.subr.mxu0 0.0
    %1893 = vmatpush2.msra.mxu0 0.0
    %1894 = vmatprep.subr.mxu0 0.0
    %1895 = vmatpush2.msra.mxu0 0.0
    %1896 = vmatprep.subr.mxu0 0.0
    %1897 = vmatpush2.msra.mxu0 0.0
    %1898 = vmatprep.subr.mxu0 0.0
    %1899 = vmatpush2.msra.mxu0 0.0
    %1900 = vmatprep.subr.mxu0 0.0
    %1901 = vmatpush2.msra.mxu0 0.0
    %1902 = vmatprep.subr.mxu0 0.0
    %1903 = vmatpush2.msra.mxu0 0.0
    %1904 = vmatprep.mubr.f32.mxu0 0.0
    %v1905 = vand.u32 %v1660, 4294901760
    %v1906 = vsub.f32 %v1660, %v1905
    %1907 = vmatmul.mubr.f32.gmra.mxu0 %v1906
    %v1908 = vpop.f32.mrf.mxu0
    %v1909 = vadd.f32 %v1829, %v1908
    %v1910 = vpop.f32.mrf.mxu0
    %1911 = vdwg.mxu0
    %1912 = vmatprep.subr.mxu0 0.0
    %1913 = vmatpush1.msra.mxu0 0.0
    %1914 = vmatprep.subr.mxu0 0.0
    %1915 = vmatpush1.msra.mxu0 0.0
    %1916 = vmatprep.subr.mxu0 0.0
    %1917 = vmatpush1.msra.mxu0 0.0
    %1918 = vmatprep.subr.mxu0 0.0
    %1919 = vmatpush1.msra.mxu0 0.0
    %1920 = vmatprep.subr.mxu0 0.0
    %1921 = vmatpush1.msra.mxu0 0.0
    %1922 = vmatprep.subr.mxu0 0.0
    %1923 = vmatpush1.msra.mxu0 0.0
    %1924 = vmatprep.subr.mxu0 0.0
    %1925 = vmatpush1.msra.mxu0 0.0
    %1926 = vmatprep.subr.mxu0 0.0
    %1927 = vmatpush1.msra.mxu0 0.0
    %1928 = vmatprep.subr.mxu0 0.0
    %1929 = vmatpush1.msra.mxu0 0.0
    %1930 = vmatprep.subr.mxu0 0.0
    %1931 = vmatpush1.msra.mxu0 0.0
    %1932 = vmatprep.subr.mxu0 0.0
    %1933 = vmatpush1.msra.mxu0 0.0
    %1934 = vmatprep.subr.mxu0 0.0
    %1935 = vmatpush1.msra.mxu0 0.0
    %1936 = vmatprep.subr.mxu0 0.0
    %v1937 = vand.u32 %v1651, 4294901760
    %1938 = vmatpush1.msra.mxu0 %v1937
    %1939 = vmatprep.subr.mxu0 0.0
    %v1940 = vand.u32 %v1650, 4294901760
    %1941 = vmatpush1.msra.mxu0 %v1940
    %1942 = vmatprep.subr.mxu0 0.0
    %v1943 = vand.u32 %v1649, 4294901760
    %1944 = vmatpush1.msra.mxu0 %v1943
    %1945 = vmatprep.subr.mxu0 0.0
    %v1946 = vand.u32 %v1648, 4294901760
    %1947 = vmatpush1.msra.mxu0 %v1946
    %1948 = vmatprep.subr.mxu0 0.0
    %1949 = vmatpush2.msra.mxu0 0.0
    %1950 = vmatprep.subr.mxu0 0.0
    %1951 = vmatpush2.msra.mxu0 0.0
    %1952 = vmatprep.subr.mxu0 0.0
    %1953 = vmatpush2.msra.mxu0 0.0
    %1954 = vmatprep.subr.mxu0 0.0
    %1955 = vmatpush2.msra.mxu0 0.0
    %1956 = vmatprep.subr.mxu0 0.0
    %1957 = vmatpush2.msra.mxu0 0.0
    %1958 = vmatprep.subr.mxu0 0.0
    %1959 = vmatpush2.msra.mxu0 0.0
    %1960 = vmatprep.subr.mxu0 0.0
    %1961 = vmatpush2.msra.mxu0 0.0
    %1962 = vmatprep.subr.mxu0 0.0
    %1963 = vmatpush2.msra.mxu0 0.0
    %1964 = vmatprep.subr.mxu0 0.0
    %1965 = vmatpush2.msra.mxu0 0.0
    %1966 = vmatprep.subr.mxu0 0.0
    %1967 = vmatpush2.msra.mxu0 0.0
    %1968 = vmatprep.subr.mxu0 0.0
    %1969 = vmatpush2.msra.mxu0 0.0
    %1970 = vmatprep.subr.mxu0 0.0
    %1971 = vmatpush2.msra.mxu0 0.0
    %1972 = vmatprep.subr.mxu0 0.0
    %1973 = vmatpush2.msra.mxu0 0.0
    %1974 = vmatprep.subr.mxu0 0.0
    %1975 = vmatpush2.msra.mxu0 0.0
    %1976 = vmatprep.subr.mxu0 0.0
    %1977 = vmatpush2.msra.mxu0 0.0
    %1978 = vmatprep.subr.mxu0 0.0
    %1979 = vmatpush2.msra.mxu0 0.0
    %1980 = vmatprep.mubr.f32.mxu0 0.0
    %v1981 = vand.u32 %v1660, 4294901760
    %v1982 = vsub.f32 %v1660, %v1981
    %v1983 = vand.u32 %v1982, 4294901760
    %1984 = vmatmul.mubr.f32.gmra.mxu0 %v1983
    %v1985 = vpop.f32.mrf.mxu0
    %v1986 = vadd.f32 %v1909, %v1985
    %v1987 = vpop.f32.mrf.mxu0
    %1988 = vdwg.mxu0
    %1989 = vmatprep.subr.mxu0 0.0
    %1990 = vmatpush1.msra.mxu0 0.0
    %1991 = vmatprep.subr.mxu0 0.0
    %1992 = vmatpush1.msra.mxu0 0.0
    %1993 = vmatprep.subr.mxu0 0.0
    %1994 = vmatpush1.msra.mxu0 0.0
    %1995 = vmatprep.subr.mxu0 0.0
    %1996 = vmatpush1.msra.mxu0 0.0
    %1997 = vmatprep.subr.mxu0 0.0
    %1998 = vmatpush1.msra.mxu0 0.0
    %1999 = vmatprep.subr.mxu0 0.0
    %2000 = vmatpush1.msra.mxu0 0.0
    %2001 = vmatprep.subr.mxu0 0.0
    %2002 = vmatpush1.msra.mxu0 0.0
    %2003 = vmatprep.subr.mxu0 0.0
    %2004 = vmatpush1.msra.mxu0 0.0
    %2005 = vmatprep.subr.mxu0 0.0
    %2006 = vmatpush1.msra.mxu0 0.0
    %2007 = vmatprep.subr.mxu0 0.0
    %2008 = vmatpush1.msra.mxu0 0.0
    %2009 = vmatprep.subr.mxu0 0.0
    %2010 = vmatpush1.msra.mxu0 0.0
    %2011 = vmatprep.subr.mxu0 0.0
    %2012 = vmatpush1.msra.mxu0 0.0
    %2013 = vmatprep.subr.mxu0 0.0
    %v2014 = vand.u32 %v1651, 4294901760
    %v2015 = vsub.f32 %v1651, %v2014
    %v2016 = vand.u32 %v2015, 4294901760
    %2017 = vmatpush1.msra.mxu0 %v2016
    %2018 = vmatprep.subr.mxu0 0.0
    %v2019 = vand.u32 %v1650, 4294901760
    %v2020 = vsub.f32 %v1650, %v2019
    %v2021 = vand.u32 %v2020, 4294901760
    %2022 = vmatpush1.msra.mxu0 %v2021
    %2023 = vmatprep.subr.mxu0 0.0
    %v2024 = vand.u32 %v1649, 4294901760
    %v2025 = vsub.f32 %v1649, %v2024
    %v2026 = vand.u32 %v2025, 4294901760
    %2027 = vmatpush1.msra.mxu0 %v2026
    %2028 = vmatprep.subr.mxu0 0.0
    %v2029 = vand.u32 %v1648, 4294901760
    %v2030 = vsub.f32 %v1648, %v2029
    %v2031 = vand.u32 %v2030, 4294901760
    %2032 = vmatpush1.msra.mxu0 %v2031
    %2033 = vmatprep.subr.mxu0 0.0
    %2034 = vmatpush2.msra.mxu0 0.0
    %2035 = vmatprep.subr.mxu0 0.0
    %2036 = vmatpush2.msra.mxu0 0.0
    %2037 = vmatprep.subr.mxu0 0.0
    %2038 = vmatpush2.msra.mxu0 0.0
    %2039 = vmatprep.subr.mxu0 0.0
    %2040 = vmatpush2.msra.mxu0 0.0
    %2041 = vmatprep.subr.mxu0 0.0
    %2042 = vmatpush2.msra.mxu0 0.0
    %2043 = vmatprep.subr.mxu0 0.0
    %2044 = vmatpush2.msra.mxu0 0.0
    %2045 = vmatprep.subr.mxu0 0.0
    %2046 = vmatpush2.msra.mxu0 0.0
    %2047 = vmatprep.subr.mxu0 0.0
    %2048 = vmatpush2.msra.mxu0 0.0
    %2049 = vmatprep.subr.mxu0 0.0
    %2050 = vmatpush2.msra.mxu0 0.0
    %2051 = vmatprep.subr.mxu0 0.0
    %2052 = vmatpush2.msra.mxu0 0.0
    %2053 = vmatprep.subr.mxu0 0.0
    %2054 = vmatpush2.msra.mxu0 0.0
    %2055 = vmatprep.subr.mxu0 0.0
    %2056 = vmatpush2.msra.mxu0 0.0
    %2057 = vmatprep.subr.mxu0 0.0
    %2058 = vmatpush2.msra.mxu0 0.0
    %2059 = vmatprep.subr.mxu0 0.0
    %2060 = vmatpush2.msra.mxu0 0.0
    %2061 = vmatprep.subr.mxu0 0.0
    %2062 = vmatpush2.msra.mxu0 0.0
    %2063 = vmatprep.subr.mxu0 0.0
    %2064 = vmatpush2.msra.mxu0 0.0
    %2065 = vmatprep.mubr.f32.mxu0 0.0
    %v2066 = vand.u32 %v1660, 4294901760
    %2067 = vmatmul.mubr.f32.gmra.mxu0 %v2066
    %v2068 = vpop.f32.mrf.mxu0
    %v2069 = vadd.f32 %v1986, %v2068
    %v2070 = vpop.f32.mrf.mxu0
    %2071 = vdwg.mxu0
    %2072 = vmatprep.subr.mxu0 0.0
    %2073 = vmatpush1.msra.mxu0 0.0
    %2074 = vmatprep.subr.mxu0 0.0
    %2075 = vmatpush1.msra.mxu0 0.0
    %2076 = vmatprep.subr.mxu0 0.0
    %2077 = vmatpush1.msra.mxu0 0.0
    %2078 = vmatprep.subr.mxu0 0.0
    %2079 = vmatpush1.msra.mxu0 0.0
    %2080 = vmatprep.subr.mxu0 0.0
    %2081 = vmatpush1.msra.mxu0 0.0
    %2082 = vmatprep.subr.mxu0 0.0
    %2083 = vmatpush1.msra.mxu0 0.0
    %2084 = vmatprep.subr.mxu0 0.0
    %2085 = vmatpush1.msra.mxu0 0.0
    %2086 = vmatprep.subr.mxu0 0.0
    %2087 = vmatpush1.msra.mxu0 0.0
    %2088 = vmatprep.subr.mxu0 0.0
    %2089 = vmatpush1.msra.mxu0 0.0
    %2090 = vmatprep.subr.mxu0 0.0
    %2091 = vmatpush1.msra.mxu0 0.0
    %2092 = vmatprep.subr.mxu0 0.0
    %2093 = vmatpush1.msra.mxu0 0.0
    %2094 = vmatprep.subr.mxu0 0.0
    %2095 = vmatpush1.msra.mxu0 0.0
    %2096 = vmatprep.subr.mxu0 0.0
    %v2097 = vand.u32 %v1651, 4294901760
    %2098 = vmatpush1.msra.mxu0 %v2097
    %2099 = vmatprep.subr.mxu0 0.0
    %v2100 = vand.u32 %v1650, 4294901760
    %2101 = vmatpush1.msra.mxu0 %v2100
    %2102 = vmatprep.subr.mxu0 0.0
    %v2103 = vand.u32 %v1649, 4294901760
    %2104 = vmatpush1.msra.mxu0 %v2103
    %2105 = vmatprep.subr.mxu0 0.0
    %v2106 = vand.u32 %v1648, 4294901760
    %2107 = vmatpush1.msra.mxu0 %v2106
    %2108 = vmatprep.subr.mxu0 0.0
    %2109 = vmatpush2.msra.mxu0 0.0
    %2110 = vmatprep.subr.mxu0 0.0
    %2111 = vmatpush2.msra.mxu0 0.0
    %2112 = vmatprep.subr.mxu0 0.0
    %2113 = vmatpush2.msra.mxu0 0.0
    %2114 = vmatprep.subr.mxu0 0.0
    %2115 = vmatpush2.msra.mxu0 0.0
    %2116 = vmatprep.subr.mxu0 0.0
    %2117 = vmatpush2.msra.mxu0 0.0
    %2118 = vmatprep.subr.mxu0 0.0
    %2119 = vmatpush2.msra.mxu0 0.0
    %2120 = vmatprep.subr.mxu0 0.0
    %2121 = vmatpush2.msra.mxu0 0.0
    %2122 = vmatprep.subr.mxu0 0.0
    %2123 = vmatpush2.msra.mxu0 0.0
    %2124 = vmatprep.subr.mxu0 0.0
    %2125 = vmatpush2.msra.mxu0 0.0
    %2126 = vmatprep.subr.mxu0 0.0
    %2127 = vmatpush2.msra.mxu0 0.0
    %2128 = vmatprep.subr.mxu0 0.0
    %2129 = vmatpush2.msra.mxu0 0.0
    %2130 = vmatprep.subr.mxu0 0.0
    %2131 = vmatpush2.msra.mxu0 0.0
    %2132 = vmatprep.subr.mxu0 0.0
    %2133 = vmatpush2.msra.mxu0 0.0
    %2134 = vmatprep.subr.mxu0 0.0
    %2135 = vmatpush2.msra.mxu0 0.0
    %2136 = vmatprep.subr.mxu0 0.0
    %2137 = vmatpush2.msra.mxu0 0.0
    %2138 = vmatprep.subr.mxu0 0.0
    %2139 = vmatpush2.msra.mxu0 0.0
    %2140 = vmatprep.mubr.f32.mxu0 0.0
    %v2141 = vand.u32 %v1660, 4294901760
    %2142 = vmatmul.mubr.f32.gmra.mxu0 %v2141
    %v2143 = vpop.f32.mrf.mxu0
    %v2144 = vadd.f32 %v2069, %v2143
    %v2145 = vpop.f32.mrf.mxu0
    %2146 = vdwg.mxu0
    %vm2147 = vcmask 58368
    %2148 = vst.msk [vmem:[#allocation2] sm:$0x3] %vm2147, %v2144
    // Predicated region
    $region38: #{tpu_custom_call.1} parent=1 // pred_check
      _
    $region39: #{tpu_custom_call.1} parent=1 // pred_check_branch
      %2150 = sbr.rel (0) target = $region41
    $region40: #{tpu_custom_call.1} parent=1 // pred_region
      %s2152 = ssub.s32 32, 32
      %2153 = vsyncadd [#allocation3], %s2152
      %s2155 = sshll.u32 [#allocation2], 4
      %s2156 = int_to_ptr.vmem [resolvable:$true] %s2155
      %2158 = dma.vmem_to_hbm [thread:$0]  %s2156, 32, %s9, [#allocation3]
    $region41: #{tpu_custom_call.1} parent=1 // pred_fallthru
      _
    // Predicated region
    $region42: #{tpu_custom_call.1} parent=1 // pred_check
      _
    $region43: #{tpu_custom_call.1} parent=1 // pred_check_branch
      %2160 = sbr.rel (0) target = $region45
    $region44: #{tpu_custom_call.1} parent=1 // pred_region
      %2161 = dma.done [#allocation3], 32
    $region45: #{tpu_custom_call.1} parent=1 // pred_fallthru
      _
    %2162 = vsyncpa [#allocation3], 1

</llo_original>
